<compile_context>
chip_gen: v6e
topology: v6e:2x2x1
jax: 0.10.0
libtpu: 0.0.40
codegen_flags: <defaults>
</compile_context>

<pallas_src>
import functools

import jax
import jax.numpy as jnp
from jax.experimental import pallas as pl
from jax.experimental.pallas import tpu as pltpu

EPS = 1e-5  # torch.nn.LayerNorm default


# ----------------------------- fused kernel --------------------------------- #

def _transformer_block_kernel(q_ref, k_ref, v_ref, m_ref,
                              wq_ref, wk_ref, wv_ref,
                              wo_ref, bo_ref,
                              g1_ref, bln1_ref,
                              w1_ref, b1_ref, w2_ref, b2_ref,
                              g2_ref, bln2_ref,
                              o_ref, *, heads, dim_head):
    """One batch element: full TransformerBlock forward, fp32 accumulation."""
    q32 = q_ref[0]                         # [Lq, E] fp32 (kept for the residual)
    q = q32.astype(jnp.bfloat16)           # bf16 MXU operands
    k = k_ref[0].astype(jnp.bfloat16)      # [Lk, E]
    v = v_ref[0].astype(jnp.bfloat16)      # [Lk, E]
    m = m_ref[0]                           # [Lq, Lk] bf16 (0/1 mask)

    # Per-head projections done as one [L,E] x [E,E] block-diagonal matmul.
    qp = jnp.dot(q, wq_ref[...], preferred_element_type=jnp.float32)
    kp = jnp.dot(k, wk_ref[...], preferred_element_type=jnp.float32)
    vp = jnp.dot(v, wv_ref[...], preferred_element_type=jnp.float32)
    qp = qp.astype(jnp.bfloat16)
    kp = kp.astype(jnp.bfloat16)
    vp = vp.astype(jnp.bfloat16)

    scale = jnp.float32(1.0 / (dim_head ** 0.5))
    neg = jnp.float32(-1e20)

    head_outs = []
    for h in range(heads):                 # static unroll over heads
        sl = slice(h * dim_head, (h + 1) * dim_head)
        qh = qp[:, sl]                     # [Lq, D] bf16
        kh = kp[:, sl]                     # [Lk, D] bf16
        vh = vp[:, sl]                     # [Lk, D] bf16

        energy = jax.lax.dot_general(      # [Lq, Lk] fp32
            qh, kh, (((1,), (1,)), ((), ())),
            preferred_element_type=jnp.float32) * scale
        energy = jnp.where(m == 0, neg, energy)

        e_max = jnp.max(energy, axis=-1, keepdims=True)
        p = jnp.exp(energy - e_max)
        denom = jnp.sum(p, axis=-1, keepdims=True)
        attn = p * pl.reciprocal(denom, approx=True)

        head_outs.append(
            jnp.dot(attn.astype(jnp.bfloat16), vh,
                    preferred_element_type=jnp.float32))       # [Lq, D]

    attn_cat = jnp.concatenate(head_outs, axis=-1)              # [Lq, E] fp32

    # attention.fc_out + residual + LayerNorm1
    a = jnp.dot(attn_cat.astype(jnp.bfloat16), wo_ref[...],
                preferred_element_type=jnp.float32) + bo_ref[...]
    x = a + q32
    mu = jnp.mean(x, axis=-1, keepdims=True)
    var = jnp.mean((x - mu) ** 2, axis=-1, keepdims=True)
    x = (x - mu) * jax.lax.rsqrt(var + EPS) * g1_ref[...] + bln1_ref[...]
    # TODO(synk): nn.Dropout treated as identity (inference semantics).

    # feed_forward: Linear -> ReLU -> Linear
    h1 = jnp.dot(x.astype(jnp.bfloat16), w1_ref[...],
                 preferred_element_type=jnp.float32) + b1_ref[...]
    h1 = jnp.maximum(h1, 0.0)
    f = jnp.dot(h1.astype(jnp.bfloat16), w2_ref[...],
                preferred_element_type=jnp.float32) + b2_ref[...]

    # residual + LayerNorm2
    y = f + x
    mu2 = jnp.mean(y, axis=-1, keepdims=True)
    var2 = jnp.mean((y - mu2) ** 2, axis=-1, keepdims=True)
    out = (y - mu2) * jax.lax.rsqrt(var2 + EPS) * g2_ref[...] + bln2_ref[...]
    o_ref[0] = out.astype(o_ref.dtype)


# ----------------------------- wrapper --------------------------------------- #

def transformer_block_forward(params, query, key, value, mask):
    N, Lq, E = query.shape
    Lk = key.shape[1]
    H = params["heads"]
    D = E // H
    F = params["w1_t"].shape[1]

    bf16 = jnp.bfloat16
    # Pack the shared per-head [D,D] projection weights into block-diagonal
    # [E,E] so the per-head projection becomes a single MXU-friendly matmul.
    eye_h = jnp.eye(H, dtype=jnp.float32)
    wq_bd = jnp.kron(eye_h, params["wq_t"]).astype(bf16)
    wk_bd = jnp.kron(eye_h, params["wk_t"]).astype(bf16)
    wv_bd = jnp.kron(eye_h, params["wv_t"]).astype(bf16)
    wo = params["wo_t"].astype(bf16)
    w1 = params["w1_t"].astype(bf16)
    w2 = params["w2_t"].astype(bf16)
    mask_b = mask.astype(bf16)

    kernel = functools.partial(_transformer_block_kernel, heads=H, dim_head=D)

    return pl.pallas_call(
        kernel,
        out_shape=jax.ShapeDtypeStruct((N, Lq, E), jnp.float32),
        grid_spec=pltpu.PrefetchScalarGridSpec(
            num_scalar_prefetch=0,
            grid=(N,),
            in_specs=[
                pl.BlockSpec((1, Lq, E), lambda n: (n, 0, 0)),   # query
                pl.BlockSpec((1, Lk, E), lambda n: (n, 0, 0)),   # key
                pl.BlockSpec((1, Lk, E), lambda n: (n, 0, 0)),   # value
                pl.BlockSpec((1, Lq, Lk), lambda n: (n, 0, 0)),  # mask (bf16)
                pl.BlockSpec((E, E), lambda n: (0, 0)),          # Wq block-diag
                pl.BlockSpec((E, E), lambda n: (0, 0)),          # Wk block-diag
                pl.BlockSpec((E, E), lambda n: (0, 0)),          # Wv block-diag
                pl.BlockSpec((E, E), lambda n: (0, 0)),          # Wo^T
                pl.BlockSpec((1, E), lambda n: (0, 0)),          # bo
                pl.BlockSpec((1, E), lambda n: (0, 0)),          # ln1 gamma
                pl.BlockSpec((1, E), lambda n: (0, 0)),          # ln1 beta
                pl.BlockSpec((E, F), lambda n: (0, 0)),          # W1^T
                pl.BlockSpec((1, F), lambda n: (0, 0)),          # b1
                pl.BlockSpec((F, E), lambda n: (0, 0)),          # W2^T
                pl.BlockSpec((1, E), lambda n: (0, 0)),          # b2
                pl.BlockSpec((1, E), lambda n: (0, 0)),          # ln2 gamma
                pl.BlockSpec((1, E), lambda n: (0, 0)),          # ln2 beta
            ],
            out_specs=pl.BlockSpec((1, Lq, E), lambda n: (n, 0, 0)),
        ),
        compiler_params=pltpu.CompilerParams(
            dimension_semantics=("parallel",),
            vmem_limit_bytes=64 * 1024 * 1024),
    )(query, key, value, mask_b,
      wq_bd, wk_bd, wv_bd,
      wo, params["bo"],
      params["ln1_g"], params["ln1_b"],
      w1, params["b1"], w2, params["b2"],
      params["ln2_g"], params["ln2_b"])


# --------------------------- params & reference ------------------------------ #

def init_params(key, embed_size, heads, forward_expansion):
    D = embed_size // heads
    F = forward_expansion * embed_size
    ks = jax.random.split(key, 12)

    def lin_w(k, out_dim, in_dim):
        # PyTorch Linear stores [out, in]; we keep the transposed [in, out].
        return (0.1 * jax.random.normal(k, (out_dim, in_dim), jnp.float32)).T

    def vec(k, dim, scale=0.05):
        return scale * jax.random.normal(k, (1, dim), jnp.float32)

    return {
        "heads": heads,
        "wq_t": lin_w(ks[0], D, D),
        "wk_t": lin_w(ks[1], D, D),
        "wv_t": lin_w(ks[2], D, D),
        "wo_t": lin_w(ks[3], embed_size, embed_size),
        "bo":   vec(ks[4], embed_size),
        "ln1_g": jnp.ones((1, embed_size), jnp.float32),
        "ln1_b": jnp.zeros((1, embed_size), jnp.float32),
        "w1_t": lin_w(ks[5], F, embed_size),
        "b1":   vec(ks[6], F),
        "w2_t": lin_w(ks[7], embed_size, F),
        "b2":   vec(ks[8], embed_size),
        "ln2_g": jnp.ones((1, embed_size), jnp.float32),
        "ln2_b": jnp.zeros((1, embed_size), jnp.float32),
    }


def reference_forward(params, query, key, value, mask):
    """Pure-JAX fp32 mirror of the PyTorch forward (correctness check)."""
    N, L, E = query.shape
    H = params["heads"]
    D = E // H
    q = query.reshape(N, L, H, D) @ params["wq_t"]
    k = key.reshape(N, L, H, D) @ params["wk_t"]
    v = value.reshape(N, L, H, D) @ params["wv_t"]
    energy = jnp.einsum("nqhd,nkhd->nhqk", q, k) / (D ** 0.5)
    energy = jnp.where(mask[:, None, :, :] == 0, -1e20, energy)
    attn = jax.nn.softmax(energy, axis=3)
    out = jnp.einsum("nhqk,nkhd->nqhd", attn, v).reshape(N, L, E)
    out = out @ params["wo_t"] + params["bo"]
    x = out + query

    def ln(t, g, b):
        mu = t.mean(-1, keepdims=True)
        var = ((t - mu) ** 2).mean(-1, keepdims=True)
        return (t - mu) / jnp.sqrt(var + EPS) * g + b

    x = ln(x, params["ln1_g"], params["ln1_b"])
    h = jnp.maximum(x @ params["w1_t"] + params["b1"], 0.0)
    f = h @ params["w2_t"] + params["b2"]
    return ln(f + x, params["ln2_g"], params["ln2_b"])


# --------------------------------- main --------------------------------------- #

if __name__ == "__main__":
    N, L, E, H, FE = 2, 8, 32, 4, 2   # batch, seq, embed, heads, forward_expansion

    root = jax.random.PRNGKey(0)
    k_p, k_q, k_k, k_v = jax.random.split(root, 4)

    params = init_params(k_p, E, H, FE)
    query = jax.random.normal(k_q, (N, L, E), jnp.float32)
    key_in = jax.random.normal(k_k, (N, L, E), jnp.float32)
    value = jax.random.normal(k_v, (N, L, E), jnp.float32)
    # causal mask, shape [N, Lq, Lk]; equals torch mask of shape (N, 1, Lq, Lk)
    mask = jnp.broadcast_to(jnp.tril(jnp.ones((L, L), jnp.float32)), (N, L, L))

    out = transformer_block_forward(params, query, key_in, value, mask)
    out = jax.block_until_ready(out)

    ref = reference_forward(params, query, key_in, value, mask)
    assert out.shape == (N, L, E)
    # bf16 MXU operands (fp32 accumulation) -> slightly looser tolerance vs fp32 ref.
    assert jnp.allclose(out, ref, atol=3e-2, rtol=3e-2), "mismatch vs JAX reference"

    print("KERNEL_OK")
</pallas_src>

<mosaic_0001>
module attributes {stable_mosaic.version = 11 : i64} {
  func.func @_transformer_block_kernel(%arg0: i32, %arg1: memref<1x8x32xf32, #tpu.memory_space<vmem>>, %arg2: memref<1x8x32xf32, #tpu.memory_space<vmem>>, %arg3: memref<1x8x32xf32, #tpu.memory_space<vmem>>, %arg4: memref<1x8x8xbf16, #tpu.memory_space<vmem>>, %arg5: memref<32x32xbf16, #tpu.memory_space<vmem>>, %arg6: memref<32x32xbf16, #tpu.memory_space<vmem>>, %arg7: memref<32x32xbf16, #tpu.memory_space<vmem>>, %arg8: memref<32x32xbf16, #tpu.memory_space<vmem>>, %arg9: memref<1x32xf32, #tpu.memory_space<vmem>>, %arg10: memref<1x32xf32, #tpu.memory_space<vmem>>, %arg11: memref<1x32xf32, #tpu.memory_space<vmem>>, %arg12: memref<32x64xbf16, #tpu.memory_space<vmem>>, %arg13: memref<1x64xf32, #tpu.memory_space<vmem>>, %arg14: memref<64x32xbf16, #tpu.memory_space<vmem>>, %arg15: memref<1x32xf32, #tpu.memory_space<vmem>>, %arg16: memref<1x32xf32, #tpu.memory_space<vmem>>, %arg17: memref<1x32xf32, #tpu.memory_space<vmem>>, %arg18: memref<1x8x32xf32, #tpu.memory_space<vmem>>) attributes {dimension_semantics = [#tpu.dimension_semantics<parallel>], iteration_bounds = array<i64: 2>, scalar_prefetch = 0 : i64, scratch_operands = 0 : i64, tpu.core_type = #tpu.core_type<tc>, window_params = [{transform_indices = @transform_0, window_bounds = array<i64: 1, 8, 32>}, {transform_indices = @transform_1, window_bounds = array<i64: 1, 8, 32>}, {transform_indices = @transform_2, window_bounds = array<i64: 1, 8, 32>}, {transform_indices = @transform_3, window_bounds = array<i64: 1, 8, 8>}, {pipeline_mode = #tpu.pipeline_mode<synchronous>, transform_indices = @transform_4, window_bounds = array<i64: 32, 32>}, {pipeline_mode = #tpu.pipeline_mode<synchronous>, transform_indices = @transform_5, window_bounds = array<i64: 32, 32>}, {pipeline_mode = #tpu.pipeline_mode<synchronous>, transform_indices = @transform_6, window_bounds = array<i64: 32, 32>}, {pipeline_mode = #tpu.pipeline_mode<synchronous>, transform_indices = @transform_7, window_bounds = array<i64: 32, 32>}, {pipeline_mode = #tpu.pipeline_mode<synchronous>, transform_indices = @transform_8, window_bounds = array<i64: 1, 32>}, {pipeline_mode = #tpu.pipeline_mode<synchronous>, transform_indices = @transform_9, window_bounds = array<i64: 1, 32>}, {pipeline_mode = #tpu.pipeline_mode<synchronous>, transform_indices = @transform_10, window_bounds = array<i64: 1, 32>}, {pipeline_mode = #tpu.pipeline_mode<synchronous>, transform_indices = @transform_11, window_bounds = array<i64: 32, 64>}, {pipeline_mode = #tpu.pipeline_mode<synchronous>, transform_indices = @transform_12, window_bounds = array<i64: 1, 64>}, {pipeline_mode = #tpu.pipeline_mode<synchronous>, transform_indices = @transform_13, window_bounds = array<i64: 64, 32>}, {pipeline_mode = #tpu.pipeline_mode<synchronous>, transform_indices = @transform_14, window_bounds = array<i64: 1, 32>}, {pipeline_mode = #tpu.pipeline_mode<synchronous>, transform_indices = @transform_15, window_bounds = array<i64: 1, 32>}, {pipeline_mode = #tpu.pipeline_mode<synchronous>, transform_indices = @transform_16, window_bounds = array<i64: 1, 32>}, {transform_indices = @transform_17, window_bounds = array<i64: 1, 8, 32>}]} {
    %c0 = arith.constant 0 : index
    %c0_0 = arith.constant 0 : index
    %c0_1 = arith.constant 0 : index
    %0 = vector.load %arg1[%c0, %c0_0, %c0_1] : memref<1x8x32xf32, #tpu.memory_space<vmem>>, vector<1x8x32xf32>
    %1 = vector.shape_cast %0 : vector<1x8x32xf32> to vector<8x32xf32>
    %2 = arith.truncf %1 : vector<8x32xf32> to vector<8x32xbf16>
    %c0_2 = arith.constant 0 : index
    %c0_3 = arith.constant 0 : index
    %c0_4 = arith.constant 0 : index
    %3 = vector.load %arg2[%c0_2, %c0_3, %c0_4] : memref<1x8x32xf32, #tpu.memory_space<vmem>>, vector<1x8x32xf32>
    %4 = vector.shape_cast %3 : vector<1x8x32xf32> to vector<8x32xf32>
    %5 = arith.truncf %4 : vector<8x32xf32> to vector<8x32xbf16>
    %c0_5 = arith.constant 0 : index
    %c0_6 = arith.constant 0 : index
    %c0_7 = arith.constant 0 : index
    %6 = vector.load %arg3[%c0_5, %c0_6, %c0_7] : memref<1x8x32xf32, #tpu.memory_space<vmem>>, vector<1x8x32xf32>
    %7 = vector.shape_cast %6 : vector<1x8x32xf32> to vector<8x32xf32>
    %8 = arith.truncf %7 : vector<8x32xf32> to vector<8x32xbf16>
    %c0_8 = arith.constant 0 : index
    %c0_9 = arith.constant 0 : index
    %c0_10 = arith.constant 0 : index
    %9 = vector.load %arg4[%c0_8, %c0_9, %c0_10] : memref<1x8x8xbf16, #tpu.memory_space<vmem>>, vector<1x8x8xbf16>
    %10 = vector.shape_cast %9 : vector<1x8x8xbf16> to vector<8x8xbf16>
    %c0_11 = arith.constant 0 : index
    %c0_12 = arith.constant 0 : index
    %11 = vector.load %arg5[%c0_11, %c0_12] : memref<32x32xbf16, #tpu.memory_space<vmem>>, vector<32x32xbf16>
    %cst = arith.constant dense<0.000000e+00> : vector<8x32xf32>
    %12 = tpu.matmul %2, %11, %cst {dimension_numbers = #tpu.dot_dimension_numbers<[1], [0], [0], [1], [0, 0, 1, 1], [], []>} : vector<8x32xbf16>, vector<32x32xbf16>, vector<8x32xf32> -> vector<8x32xf32>
    %c0_13 = arith.constant 0 : index
    %c0_14 = arith.constant 0 : index
    %13 = vector.load %arg6[%c0_13, %c0_14] : memref<32x32xbf16, #tpu.memory_space<vmem>>, vector<32x32xbf16>
    %cst_15 = arith.constant dense<0.000000e+00> : vector<8x32xf32>
    %14 = tpu.matmul %5, %13, %cst_15 {dimension_numbers = #tpu.dot_dimension_numbers<[1], [0], [0], [1], [0, 0, 1, 1], [], []>} : vector<8x32xbf16>, vector<32x32xbf16>, vector<8x32xf32> -> vector<8x32xf32>
    %c0_16 = arith.constant 0 : index
    %c0_17 = arith.constant 0 : index
    %15 = vector.load %arg7[%c0_16, %c0_17] : memref<32x32xbf16, #tpu.memory_space<vmem>>, vector<32x32xbf16>
    %cst_18 = arith.constant dense<0.000000e+00> : vector<8x32xf32>
    %16 = tpu.matmul %8, %15, %cst_18 {dimension_numbers = #tpu.dot_dimension_numbers<[1], [0], [0], [1], [0, 0, 1, 1], [], []>} : vector<8x32xbf16>, vector<32x32xbf16>, vector<8x32xf32> -> vector<8x32xf32>
    %17 = arith.truncf %12 : vector<8x32xf32> to vector<8x32xbf16>
    %18 = arith.truncf %14 : vector<8x32xf32> to vector<8x32xbf16>
    %19 = arith.truncf %16 : vector<8x32xf32> to vector<8x32xbf16>
    %20 = vector.extract_strided_slice %17 {offsets = [0, 0], sizes = [8, 8], strides = [1, 1]} : vector<8x32xbf16> to vector<8x8xbf16>
    %21 = vector.extract_strided_slice %18 {offsets = [0, 0], sizes = [8, 8], strides = [1, 1]} : vector<8x32xbf16> to vector<8x8xbf16>
    %22 = vector.extract_strided_slice %19 {offsets = [0, 0], sizes = [8, 8], strides = [1, 1]} : vector<8x32xbf16> to vector<8x8xbf16>
    %cst_19 = arith.constant dense<0.000000e+00> : vector<8x8xf32>
    %23 = tpu.matmul %20, %21, %cst_19 {dimension_numbers = #tpu.dot_dimension_numbers<[1], [1], [0], [0], [0, 0, 1, 0], [], []>} : vector<8x8xbf16>, vector<8x8xbf16>, vector<8x8xf32> -> vector<8x8xf32>
    %cst_20 = arith.constant 0.353553385 : f32
    %24 = vector.broadcast %cst_20 : f32 to vector<8x8xf32>
    %25 = arith.mulf %23, %24 : vector<8x8xf32>
    %cst_21 = arith.constant 0.000000e+00 : bf16
    %26 = vector.broadcast %cst_21 : bf16 to vector<8x8xbf16>
    %27 = arith.cmpf oeq, %10, %26 : vector<8x8xbf16>
    %cst_22 = arith.constant -1.000000e+20 : f32
    %28 = vector.broadcast %cst_22 : f32 to vector<8x8xf32>
    %29 = arith.select %27, %28, %25 : vector<8x8xi1>, vector<8x8xf32>
    %cst_23 = arith.constant dense<0xFF800000> : vector<8xf32>
    %30 = vector.multi_reduction <maximumf>, %29, %cst_23 [1] : vector<8x8xf32> to vector<8xf32>
    %31 = vector.shape_cast %30 : vector<8xf32> to vector<8x1xf32>
    %32 = vector.broadcast %31 : vector<8x1xf32> to vector<8x8xf32>
    %33 = arith.subf %29, %32 : vector<8x8xf32>
    %34 = math.exp %33 : vector<8x8xf32>
    %cst_24 = arith.constant dense<0.000000e+00> : vector<8xf32>
    %35 = vector.multi_reduction <add>, %34, %cst_24 [1] : vector<8x8xf32> to vector<8xf32>
    %36 = vector.shape_cast %35 : vector<8xf32> to vector<8x1xf32>
    %37 = tpu.reciprocal %36 {approx = true} : vector<8x1xf32> -> vector<8x1xf32>
    %38 = vector.broadcast %37 : vector<8x1xf32> to vector<8x8xf32>
    %39 = arith.mulf %34, %38 : vector<8x8xf32>
    %40 = arith.truncf %39 : vector<8x8xf32> to vector<8x8xbf16>
    %cst_25 = arith.constant dense<0.000000e+00> : vector<8x8xf32>
    %41 = tpu.matmul %40, %22, %cst_25 {dimension_numbers = #tpu.dot_dimension_numbers<[1], [0], [0], [1], [0, 0, 1, 1], [], []>} : vector<8x8xbf16>, vector<8x8xbf16>, vector<8x8xf32> -> vector<8x8xf32>
    %42 = vector.extract_strided_slice %17 {offsets = [0, 8], sizes = [8, 8], strides = [1, 1]} : vector<8x32xbf16> to vector<8x8xbf16>
    %43 = vector.extract_strided_slice %18 {offsets = [0, 8], sizes = [8, 8], strides = [1, 1]} : vector<8x32xbf16> to vector<8x8xbf16>
    %44 = vector.extract_strided_slice %19 {offsets = [0, 8], sizes = [8, 8], strides = [1, 1]} : vector<8x32xbf16> to vector<8x8xbf16>
    %cst_26 = arith.constant dense<0.000000e+00> : vector<8x8xf32>
    %45 = tpu.matmul %42, %43, %cst_26 {dimension_numbers = #tpu.dot_dimension_numbers<[1], [1], [0], [0], [0, 0, 1, 0], [], []>} : vector<8x8xbf16>, vector<8x8xbf16>, vector<8x8xf32> -> vector<8x8xf32>
    %cst_27 = arith.constant 0.353553385 : f32
    %46 = vector.broadcast %cst_27 : f32 to vector<8x8xf32>
    %47 = arith.mulf %45, %46 : vector<8x8xf32>
    %cst_28 = arith.constant 0.000000e+00 : bf16
    %48 = vector.broadcast %cst_28 : bf16 to vector<8x8xbf16>
    %49 = arith.cmpf oeq, %10, %48 : vector<8x8xbf16>
    %cst_29 = arith.constant -1.000000e+20 : f32
    %50 = vector.broadcast %cst_29 : f32 to vector<8x8xf32>
    %51 = arith.select %49, %50, %47 : vector<8x8xi1>, vector<8x8xf32>
    %cst_30 = arith.constant dense<0xFF800000> : vector<8xf32>
    %52 = vector.multi_reduction <maximumf>, %51, %cst_30 [1] : vector<8x8xf32> to vector<8xf32>
    %53 = vector.shape_cast %52 : vector<8xf32> to vector<8x1xf32>
    %54 = vector.broadcast %53 : vector<8x1xf32> to vector<8x8xf32>
    %55 = arith.subf %51, %54 : vector<8x8xf32>
    %56 = math.exp %55 : vector<8x8xf32>
    %cst_31 = arith.constant dense<0.000000e+00> : vector<8xf32>
    %57 = vector.multi_reduction <add>, %56, %cst_31 [1] : vector<8x8xf32> to vector<8xf32>
    %58 = vector.shape_cast %57 : vector<8xf32> to vector<8x1xf32>
    %59 = tpu.reciprocal %58 {approx = true} : vector<8x1xf32> -> vector<8x1xf32>
    %60 = vector.broadcast %59 : vector<8x1xf32> to vector<8x8xf32>
    %61 = arith.mulf %56, %60 : vector<8x8xf32>
    %62 = arith.truncf %61 : vector<8x8xf32> to vector<8x8xbf16>
    %cst_32 = arith.constant dense<0.000000e+00> : vector<8x8xf32>
    %63 = tpu.matmul %62, %44, %cst_32 {dimension_numbers = #tpu.dot_dimension_numbers<[1], [0], [0], [1], [0, 0, 1, 1], [], []>} : vector<8x8xbf16>, vector<8x8xbf16>, vector<8x8xf32> -> vector<8x8xf32>
    %64 = vector.extract_strided_slice %17 {offsets = [0, 16], sizes = [8, 8], strides = [1, 1]} : vector<8x32xbf16> to vector<8x8xbf16>
    %65 = vector.extract_strided_slice %18 {offsets = [0, 16], sizes = [8, 8], strides = [1, 1]} : vector<8x32xbf16> to vector<8x8xbf16>
    %66 = vector.extract_strided_slice %19 {offsets = [0, 16], sizes = [8, 8], strides = [1, 1]} : vector<8x32xbf16> to vector<8x8xbf16>
    %cst_33 = arith.constant dense<0.000000e+00> : vector<8x8xf32>
    %67 = tpu.matmul %64, %65, %cst_33 {dimension_numbers = #tpu.dot_dimension_numbers<[1], [1], [0], [0], [0, 0, 1, 0], [], []>} : vector<8x8xbf16>, vector<8x8xbf16>, vector<8x8xf32> -> vector<8x8xf32>
    %cst_34 = arith.constant 0.353553385 : f32
    %68 = vector.broadcast %cst_34 : f32 to vector<8x8xf32>
    %69 = arith.mulf %67, %68 : vector<8x8xf32>
    %cst_35 = arith.constant 0.000000e+00 : bf16
    %70 = vector.broadcast %cst_35 : bf16 to vector<8x8xbf16>
    %71 = arith.cmpf oeq, %10, %70 : vector<8x8xbf16>
    %cst_36 = arith.constant -1.000000e+20 : f32
    %72 = vector.broadcast %cst_36 : f32 to vector<8x8xf32>
    %73 = arith.select %71, %72, %69 : vector<8x8xi1>, vector<8x8xf32>
    %cst_37 = arith.constant dense<0xFF800000> : vector<8xf32>
    %74 = vector.multi_reduction <maximumf>, %73, %cst_37 [1] : vector<8x8xf32> to vector<8xf32>
    %75 = vector.shape_cast %74 : vector<8xf32> to vector<8x1xf32>
    %76 = vector.broadcast %75 : vector<8x1xf32> to vector<8x8xf32>
    %77 = arith.subf %73, %76 : vector<8x8xf32>
    %78 = math.exp %77 : vector<8x8xf32>
    %cst_38 = arith.constant dense<0.000000e+00> : vector<8xf32>
    %79 = vector.multi_reduction <add>, %78, %cst_38 [1] : vector<8x8xf32> to vector<8xf32>
    %80 = vector.shape_cast %79 : vector<8xf32> to vector<8x1xf32>
    %81 = tpu.reciprocal %80 {approx = true} : vector<8x1xf32> -> vector<8x1xf32>
    %82 = vector.broadcast %81 : vector<8x1xf32> to vector<8x8xf32>
    %83 = arith.mulf %78, %82 : vector<8x8xf32>
    %84 = arith.truncf %83 : vector<8x8xf32> to vector<8x8xbf16>
    %cst_39 = arith.constant dense<0.000000e+00> : vector<8x8xf32>
    %85 = tpu.matmul %84, %66, %cst_39 {dimension_numbers = #tpu.dot_dimension_numbers<[1], [0], [0], [1], [0, 0, 1, 1], [], []>} : vector<8x8xbf16>, vector<8x8xbf16>, vector<8x8xf32> -> vector<8x8xf32>
    %86 = vector.extract_strided_slice %17 {offsets = [0, 24], sizes = [8, 8], strides = [1, 1]} : vector<8x32xbf16> to vector<8x8xbf16>
    %87 = vector.extract_strided_slice %18 {offsets = [0, 24], sizes = [8, 8], strides = [1, 1]} : vector<8x32xbf16> to vector<8x8xbf16>
    %88 = vector.extract_strided_slice %19 {offsets = [0, 24], sizes = [8, 8], strides = [1, 1]} : vector<8x32xbf16> to vector<8x8xbf16>
    %cst_40 = arith.constant dense<0.000000e+00> : vector<8x8xf32>
    %89 = tpu.matmul %86, %87, %cst_40 {dimension_numbers = #tpu.dot_dimension_numbers<[1], [1], [0], [0], [0, 0, 1, 0], [], []>} : vector<8x8xbf16>, vector<8x8xbf16>, vector<8x8xf32> -> vector<8x8xf32>
    %cst_41 = arith.constant 0.353553385 : f32
    %90 = vector.broadcast %cst_41 : f32 to vector<8x8xf32>
    %91 = arith.mulf %89, %90 : vector<8x8xf32>
    %cst_42 = arith.constant 0.000000e+00 : bf16
    %92 = vector.broadcast %cst_42 : bf16 to vector<8x8xbf16>
    %93 = arith.cmpf oeq, %10, %92 : vector<8x8xbf16>
    %cst_43 = arith.constant -1.000000e+20 : f32
    %94 = vector.broadcast %cst_43 : f32 to vector<8x8xf32>
    %95 = arith.select %93, %94, %91 : vector<8x8xi1>, vector<8x8xf32>
    %cst_44 = arith.constant dense<0xFF800000> : vector<8xf32>
    %96 = vector.multi_reduction <maximumf>, %95, %cst_44 [1] : vector<8x8xf32> to vector<8xf32>
    %97 = vector.shape_cast %96 : vector<8xf32> to vector<8x1xf32>
    %98 = vector.broadcast %97 : vector<8x1xf32> to vector<8x8xf32>
    %99 = arith.subf %95, %98 : vector<8x8xf32>
    %100 = math.exp %99 : vector<8x8xf32>
    %cst_45 = arith.constant dense<0.000000e+00> : vector<8xf32>
    %101 = vector.multi_reduction <add>, %100, %cst_45 [1] : vector<8x8xf32> to vector<8xf32>
    %102 = vector.shape_cast %101 : vector<8xf32> to vector<8x1xf32>
    %103 = tpu.reciprocal %102 {approx = true} : vector<8x1xf32> -> vector<8x1xf32>
    %104 = vector.broadcast %103 : vector<8x1xf32> to vector<8x8xf32>
    %105 = arith.mulf %100, %104 : vector<8x8xf32>
    %106 = arith.truncf %105 : vector<8x8xf32> to vector<8x8xbf16>
    %cst_46 = arith.constant dense<0.000000e+00> : vector<8x8xf32>
    %107 = tpu.matmul %106, %88, %cst_46 {dimension_numbers = #tpu.dot_dimension_numbers<[1], [0], [0], [1], [0, 0, 1, 1], [], []>} : vector<8x8xbf16>, vector<8x8xbf16>, vector<8x8xf32> -> vector<8x8xf32>
    %108 = tpu.concatenate %41, %63, %85, %107 in 1 : vector<8x8xf32>, vector<8x8xf32>, vector<8x8xf32>, vector<8x8xf32> -> vector<8x32xf32>
    %109 = arith.truncf %108 : vector<8x32xf32> to vector<8x32xbf16>
    %c0_47 = arith.constant 0 : index
    %c0_48 = arith.constant 0 : index
    %110 = vector.load %arg8[%c0_47, %c0_48] : memref<32x32xbf16, #tpu.memory_space<vmem>>, vector<32x32xbf16>
    %cst_49 = arith.constant dense<0.000000e+00> : vector<8x32xf32>
    %111 = tpu.matmul %109, %110, %cst_49 {dimension_numbers = #tpu.dot_dimension_numbers<[1], [0], [0], [1], [0, 0, 1, 1], [], []>} : vector<8x32xbf16>, vector<32x32xbf16>, vector<8x32xf32> -> vector<8x32xf32>
    %c0_50 = arith.constant 0 : index
    %c0_51 = arith.constant 0 : index
    %112 = vector.load %arg9[%c0_50, %c0_51] : memref<1x32xf32, #tpu.memory_space<vmem>>, vector<1x32xf32>
    %113 = vector.broadcast %112 : vector<1x32xf32> to vector<8x32xf32>
    %114 = arith.addf %111, %113 : vector<8x32xf32>
    %115 = arith.addf %114, %1 : vector<8x32xf32>
    %cst_52 = arith.constant dense<0.000000e+00> : vector<8xf32>
    %116 = vector.multi_reduction <add>, %115, %cst_52 [1] : vector<8x32xf32> to vector<8xf32>
    %117 = vector.shape_cast %116 : vector<8xf32> to vector<8x1xf32>
    %cst_53 = arith.constant 3.200000e+01 : f32
    %118 = vector.broadcast %cst_53 : f32 to vector<8x1xf32>
    %119 = arith.divf %117, %118 : vector<8x1xf32>
    %120 = vector.broadcast %119 : vector<8x1xf32> to vector<8x32xf32>
    %121 = arith.subf %115, %120 : vector<8x32xf32>
    %122 = arith.mulf %121, %121 : vector<8x32xf32>
    %cst_54 = arith.constant dense<0.000000e+00> : vector<8xf32>
    %123 = vector.multi_reduction <add>, %122, %cst_54 [1] : vector<8x32xf32> to vector<8xf32>
    %124 = vector.shape_cast %123 : vector<8xf32> to vector<8x1xf32>
    %cst_55 = arith.constant 3.200000e+01 : f32
    %125 = vector.broadcast %cst_55 : f32 to vector<8x1xf32>
    %126 = arith.divf %124, %125 : vector<8x1xf32>
    %127 = vector.broadcast %119 : vector<8x1xf32> to vector<8x32xf32>
    %128 = arith.subf %115, %127 : vector<8x32xf32>
    %cst_56 = arith.constant 9.99999974E-6 : f32
    %129 = vector.broadcast %cst_56 : f32 to vector<8x1xf32>
    %130 = arith.addf %126, %129 : vector<8x1xf32>
    %131 = math.rsqrt %130 : vector<8x1xf32>
    %132 = vector.broadcast %131 : vector<8x1xf32> to vector<8x32xf32>
    %133 = arith.mulf %128, %132 : vector<8x32xf32>
    %c0_57 = arith.constant 0 : index
    %c0_58 = arith.constant 0 : index
    %134 = vector.load %arg10[%c0_57, %c0_58] : memref<1x32xf32, #tpu.memory_space<vmem>>, vector<1x32xf32>
    %135 = vector.broadcast %134 : vector<1x32xf32> to vector<8x32xf32>
    %136 = arith.mulf %133, %135 : vector<8x32xf32>
    %c0_59 = arith.constant 0 : index
    %c0_60 = arith.constant 0 : index
    %137 = vector.load %arg11[%c0_59, %c0_60] : memref<1x32xf32, #tpu.memory_space<vmem>>, vector<1x32xf32>
    %138 = vector.broadcast %137 : vector<1x32xf32> to vector<8x32xf32>
    %139 = arith.addf %136, %138 : vector<8x32xf32>
    %140 = arith.truncf %139 : vector<8x32xf32> to vector<8x32xbf16>
    %c0_61 = arith.constant 0 : index
    %c0_62 = arith.constant 0 : index
    %141 = vector.load %arg12[%c0_61, %c0_62] : memref<32x64xbf16, #tpu.memory_space<vmem>>, vector<32x64xbf16>
    %cst_63 = arith.constant dense<0.000000e+00> : vector<8x64xf32>
    %142 = tpu.matmul %140, %141, %cst_63 {dimension_numbers = #tpu.dot_dimension_numbers<[1], [0], [0], [1], [0, 0, 1, 1], [], []>} : vector<8x32xbf16>, vector<32x64xbf16>, vector<8x64xf32> -> vector<8x64xf32>
    %c0_64 = arith.constant 0 : index
    %c0_65 = arith.constant 0 : index
    %143 = vector.load %arg13[%c0_64, %c0_65] : memref<1x64xf32, #tpu.memory_space<vmem>>, vector<1x64xf32>
    %144 = vector.broadcast %143 : vector<1x64xf32> to vector<8x64xf32>
    %145 = arith.addf %142, %144 : vector<8x64xf32>
    %cst_66 = arith.constant 0.000000e+00 : f32
    %146 = vector.broadcast %cst_66 : f32 to vector<8x64xf32>
    %147 = arith.maximumf %145, %146 : vector<8x64xf32>
    %148 = arith.truncf %147 : vector<8x64xf32> to vector<8x64xbf16>
    %c0_67 = arith.constant 0 : index
    %c0_68 = arith.constant 0 : index
    %149 = vector.load %arg14[%c0_67, %c0_68] : memref<64x32xbf16, #tpu.memory_space<vmem>>, vector<64x32xbf16>
    %cst_69 = arith.constant dense<0.000000e+00> : vector<8x32xf32>
    %150 = tpu.matmul %148, %149, %cst_69 {dimension_numbers = #tpu.dot_dimension_numbers<[1], [0], [0], [1], [0, 0, 1, 1], [], []>} : vector<8x64xbf16>, vector<64x32xbf16>, vector<8x32xf32> -> vector<8x32xf32>
    %c0_70 = arith.constant 0 : index
    %c0_71 = arith.constant 0 : index
    %151 = vector.load %arg15[%c0_70, %c0_71] : memref<1x32xf32, #tpu.memory_space<vmem>>, vector<1x32xf32>
    %152 = vector.broadcast %151 : vector<1x32xf32> to vector<8x32xf32>
    %153 = arith.addf %150, %152 : vector<8x32xf32>
    %154 = arith.addf %153, %139 : vector<8x32xf32>
    %cst_72 = arith.constant dense<0.000000e+00> : vector<8xf32>
    %155 = vector.multi_reduction <add>, %154, %cst_72 [1] : vector<8x32xf32> to vector<8xf32>
    %156 = vector.shape_cast %155 : vector<8xf32> to vector<8x1xf32>
    %cst_73 = arith.constant 3.200000e+01 : f32
    %157 = vector.broadcast %cst_73 : f32 to vector<8x1xf32>
    %158 = arith.divf %156, %157 : vector<8x1xf32>
    %159 = vector.broadcast %158 : vector<8x1xf32> to vector<8x32xf32>
    %160 = arith.subf %154, %159 : vector<8x32xf32>
    %161 = arith.mulf %160, %160 : vector<8x32xf32>
    %cst_74 = arith.constant dense<0.000000e+00> : vector<8xf32>
    %162 = vector.multi_reduction <add>, %161, %cst_74 [1] : vector<8x32xf32> to vector<8xf32>
    %163 = vector.shape_cast %162 : vector<8xf32> to vector<8x1xf32>
    %cst_75 = arith.constant 3.200000e+01 : f32
    %164 = vector.broadcast %cst_75 : f32 to vector<8x1xf32>
    %165 = arith.divf %163, %164 : vector<8x1xf32>
    %166 = vector.broadcast %158 : vector<8x1xf32> to vector<8x32xf32>
    %167 = arith.subf %154, %166 : vector<8x32xf32>
    %cst_76 = arith.constant 9.99999974E-6 : f32
    %168 = vector.broadcast %cst_76 : f32 to vector<8x1xf32>
    %169 = arith.addf %165, %168 : vector<8x1xf32>
    %170 = math.rsqrt %169 : vector<8x1xf32>
    %171 = vector.broadcast %170 : vector<8x1xf32> to vector<8x32xf32>
    %172 = arith.mulf %167, %171 : vector<8x32xf32>
    %c0_77 = arith.constant 0 : index
    %c0_78 = arith.constant 0 : index
    %173 = vector.load %arg16[%c0_77, %c0_78] : memref<1x32xf32, #tpu.memory_space<vmem>>, vector<1x32xf32>
    %174 = vector.broadcast %173 : vector<1x32xf32> to vector<8x32xf32>
    %175 = arith.mulf %172, %174 : vector<8x32xf32>
    %c0_79 = arith.constant 0 : index
    %c0_80 = arith.constant 0 : index
    %176 = vector.load %arg17[%c0_79, %c0_80] : memref<1x32xf32, #tpu.memory_space<vmem>>, vector<1x32xf32>
    %177 = vector.broadcast %176 : vector<1x32xf32> to vector<8x32xf32>
    %178 = arith.addf %175, %177 : vector<8x32xf32>
    %c0_81 = arith.constant 0 : index
    %c0_82 = arith.constant 0 : index
    %c0_83 = arith.constant 0 : index
    %179 = vector.load %arg18[%c0_81, %c0_82, %c0_83] : memref<1x8x32xf32, #tpu.memory_space<vmem>>, vector<1x8x32xf32>
    %180 = vector.shape_cast %179 : vector<1x8x32xf32> to vector<8x32xf32>
    %181 = vector.shape_cast %178 : vector<8x32xf32> to vector<1x8x32xf32>
    tpu.vector_store %arg18[%c0_81, %c0_82, %c0_83], %181 {strides = array<i32>} : memref<1x8x32xf32, #tpu.memory_space<vmem>>, vector<1x8x32xf32>,
    return
  }
  func.func @transform_0(%arg0: i32) -> (i32, i32, i32) {
    %c0_i32 = arith.constant 0 : i32
    %c0_i32_0 = arith.constant 0 : i32
    %c0_i32_1 = arith.constant 0 : i32
    return %arg0, %c0_i32, %c0_i32_0 : i32, i32, i32
  }
  func.func @transform_1(%arg0: i32) -> (i32, i32, i32) {
    %c0_i32 = arith.constant 0 : i32
    %c0_i32_0 = arith.constant 0 : i32
    %c0_i32_1 = arith.constant 0 : i32
    return %arg0, %c0_i32, %c0_i32_0 : i32, i32, i32
  }
  func.func @transform_2(%arg0: i32) -> (i32, i32, i32) {
    %c0_i32 = arith.constant 0 : i32
    %c0_i32_0 = arith.constant 0 : i32
    %c0_i32_1 = arith.constant 0 : i32
    return %arg0, %c0_i32, %c0_i32_0 : i32, i32, i32
  }
  func.func @transform_3(%arg0: i32) -> (i32, i32, i32) {
    %c0_i32 = arith.constant 0 : i32
    %c0_i32_0 = arith.constant 0 : i32
    %c0_i32_1 = arith.constant 0 : i32
    return %arg0, %c0_i32, %c0_i32_0 : i32, i32, i32
  }
  func.func @transform_4(%arg0: i32) -> (i32, i32) {
    %c0_i32 = arith.constant 0 : i32
    %c0_i32_0 = arith.constant 0 : i32
    %c0_i32_1 = arith.constant 0 : i32
    return %c0_i32, %c0_i32_0 : i32, i32
  }
  func.func @transform_5(%arg0: i32) -> (i32, i32) {
    %c0_i32 = arith.constant 0 : i32
    %c0_i32_0 = arith.constant 0 : i32
    %c0_i32_1 = arith.constant 0 : i32
    return %c0_i32, %c0_i32_0 : i32, i32
  }
  func.func @transform_6(%arg0: i32) -> (i32, i32) {
    %c0_i32 = arith.constant 0 : i32
    %c0_i32_0 = arith.constant 0 : i32
    %c0_i32_1 = arith.constant 0 : i32
    return %c0_i32, %c0_i32_0 : i32, i32
  }
  func.func @transform_7(%arg0: i32) -> (i32, i32) {
    %c0_i32 = arith.constant 0 : i32
    %c0_i32_0 = arith.constant 0 : i32
    %c0_i32_1 = arith.constant 0 : i32
    return %c0_i32, %c0_i32_0 : i32, i32
  }
  func.func @transform_8(%arg0: i32) -> (i32, i32) {
    %c0_i32 = arith.constant 0 : i32
    %c0_i32_0 = arith.constant 0 : i32
    %c0_i32_1 = arith.constant 0 : i32
    return %c0_i32, %c0_i32_0 : i32, i32
  }
  func.func @transform_9(%arg0: i32) -> (i32, i32) {
    %c0_i32 = arith.constant 0 : i32
    %c0_i32_0 = arith.constant 0 : i32
    %c0_i32_1 = arith.constant 0 : i32
    return %c0_i32, %c0_i32_0 : i32, i32
  }
  func.func @transform_10(%arg0: i32) -> (i32, i32) {
    %c0_i32 = arith.constant 0 : i32
    %c0_i32_0 = arith.constant 0 : i32
    %c0_i32_1 = arith.constant 0 : i32
    return %c0_i32, %c0_i32_0 : i32, i32
  }
  func.func @transform_11(%arg0: i32) -> (i32, i32) {
    %c0_i32 = arith.constant 0 : i32
    %c0_i32_0 = arith.constant 0 : i32
    %c0_i32_1 = arith.constant 0 : i32
    return %c0_i32, %c0_i32_0 : i32, i32
  }
  func.func @transform_12(%arg0: i32) -> (i32, i32) {
    %c0_i32 = arith.constant 0 : i32
    %c0_i32_0 = arith.constant 0 : i32
    %c0_i32_1 = arith.constant 0 : i32
    return %c0_i32, %c0_i32_0 : i32, i32
  }
  func.func @transform_13(%arg0: i32) -> (i32, i32) {
    %c0_i32 = arith.constant 0 : i32
    %c0_i32_0 = arith.constant 0 : i32
    %c0_i32_1 = arith.constant 0 : i32
    return %c0_i32, %c0_i32_0 : i32, i32
  }
  func.func @transform_14(%arg0: i32) -> (i32, i32) {
    %c0_i32 = arith.constant 0 : i32
    %c0_i32_0 = arith.constant 0 : i32
    %c0_i32_1 = arith.constant 0 : i32
    return %c0_i32, %c0_i32_0 : i32, i32
  }
  func.func @transform_15(%arg0: i32) -> (i32, i32) {
    %c0_i32 = arith.constant 0 : i32
    %c0_i32_0 = arith.constant 0 : i32
    %c0_i32_1 = arith.constant 0 : i32
    return %c0_i32, %c0_i32_0 : i32, i32
  }
  func.func @transform_16(%arg0: i32) -> (i32, i32) {
    %c0_i32 = arith.constant 0 : i32
    %c0_i32_0 = arith.constant 0 : i32
    %c0_i32_1 = arith.constant 0 : i32
    return %c0_i32, %c0_i32_0 : i32, i32
  }
  func.func @transform_17(%arg0: i32) -> (i32, i32, i32) {
    %c0_i32 = arith.constant 0 : i32
    %c0_i32_0 = arith.constant 0 : i32
    %c0_i32_1 = arith.constant 0 : i32
    return %arg0, %c0_i32, %c0_i32_0 : i32, i32, i32
  }
}

</mosaic_0001>

<llo_original>
// kernel: tpu_custom_call.1
$region0: #{tpu_custom_call.1}
  #allocation0 [shape = 'u32[]', space=smem, size = 0x4, offset = 0x4, fixed_abs, tag = 'smem constant byte address 0x4 - core index']
  #allocation1 [shape = 'u32[144,128]{1,0:T(1,128)}', space=vmem, size = 0x12000, scoped, tag = 'internal scratch']
  %s0 = inlined_call_operand.vmem [shape: f32[2,8,32], index: 0, kind: input, shape index: {}]
  %s1 = inlined_call_operand.vmem [shape: f32[2,8,32], index: 1, kind: input, shape index: {}]
  %s2 = inlined_call_operand.vmem [shape: f32[2,8,32], index: 2, kind: input, shape index: {}]
  %s3 = inlined_call_operand.hbm [shape: bf16[2,8,8], index: 3, kind: input, shape index: {}]
  %s4 = inlined_call_operand.hbm [shape: bf16[32,32], index: 4, kind: input, shape index: {}]
  %s5 = inlined_call_operand.hbm [shape: bf16[32,32], index: 5, kind: input, shape index: {}]
  %s6 = inlined_call_operand.hbm [shape: bf16[32,32], index: 6, kind: input, shape index: {}]
  %s7 = inlined_call_operand.hbm [shape: bf16[32,32], index: 7, kind: input, shape index: {}]
  %s8 = inlined_call_operand.vmem [shape: f32[1,32], index: 8, kind: input, shape index: {}]
  %s9 = inlined_call_operand.vmem [shape: f32[1,32], index: 9, kind: input, shape index: {}]
  %s10 = inlined_call_operand.vmem [shape: f32[1,32], index: 10, kind: input, shape index: {}]
  %s11 = inlined_call_operand.hbm [shape: bf16[32,64], index: 11, kind: input, shape index: {}]
  %s12 = inlined_call_operand.vmem [shape: f32[1,64], index: 12, kind: input, shape index: {}]
  %s13 = inlined_call_operand.vmem [shape: bf16[64,32], index: 13, kind: input, shape index: {}]
  %s14 = inlined_call_operand.vmem [shape: f32[1,32], index: 14, kind: input, shape index: {}]
  %s15 = inlined_call_operand.vmem [shape: f32[1,32], index: 15, kind: input, shape index: {}]
  %s16 = inlined_call_operand.vmem [shape: f32[1,32], index: 16, kind: input, shape index: {}]
  %s17 = inlined_call_operand.hbm [shape: f32[2,8,32], index: 17, kind: output, shape index: {}]
  %s18 = sld [smem:[#allocation0]]
  $region125: #{tpu_custom_call.1} parent=0
    _
  %s20 = ssub.s32 1, %s18
  %s21 = scalar_select 0, %s20, %s18
  $region1: #{tpu_custom_call.1} parent=0
    #allocation2 [shape = 'u8[4096]{0}', space=vmem, size = 0x1000, scoped, tag = 'input window, operand 3']
    #allocation3 [shape = 's32[2]{0}', space=sflag, size = 0x8, scoped, tag = 'scoped memory for tpu_custom_call.1']
    #allocation4 [shape = 's32[2]{0}', space=sflag, size = 0x8, scoped, tag = 'scoped memory for tpu_custom_call.1']
    #allocation5 [shape = 'u8[8192]{0}', space=vmem, size = 0x2000, scoped, tag = 'input window, operand 4, single buffered']
    #allocation6 [shape = 's32[1]{0}', space=sflag, size = 0x4, scoped, tag = 'scoped memory for tpu_custom_call.1']
    #allocation7 [shape = 'u8[8192]{0}', space=vmem, size = 0x2000, scoped, tag = 'input window, operand 5, single buffered']
    #allocation8 [shape = 'u8[8192]{0}', space=vmem, size = 0x2000, scoped, tag = 'input window, operand 6, single buffered']
    #allocation9 [shape = 's32[1]{0}', space=sflag, size = 0x4, scoped, tag = 'scoped memory for tpu_custom_call.1']
    #allocation10 [shape = 'u8[8192]{0}', space=vmem, size = 0x2000, scoped, tag = 'input window, operand 7, single buffered']
    #allocation11 [shape = 'u8[8192]{0}', space=vmem, size = 0x2000, scoped, tag = 'input window, operand 11, single buffered']
    #allocation12 [shape = 's32[1]{0}', space=sflag, size = 0x4, scoped, tag = 'scoped memory for tpu_custom_call.1']
    #allocation13 [shape = 'u8[8192]{0}', space=vmem, size = 0x2000, scoped, tag = 'output window, operand 0']
    %22 = vsyncpa [#allocation3], 0
    %s23 = scalar_lea.sflag [#allocation3], 1
    %24 = vsyncpa %s23, 0
    %25 = vsyncpa [#allocation6], 0
    %26 = vsyncpa [#allocation9], 0
    %27 = vsyncpa [#allocation12], 0
    %28 = vsyncpa [#allocation4], 0
    %s29 = scalar_lea.sflag [#allocation4], 1
    %30 = vsyncpa %s29, 0
    loop: start=0, step=1, limit=4
    $region2: #{tpu_custom_call.1} parent=1 // loop_pre_header
      _
    $region3: #{tpu_custom_call.1} parent=1 // loop_header
      %s32 = sphi 0, %s36
      %p33 = scmp.ge.s32.totalorder %s32, 4
      %s42 = sphi 0, %s44
      %s45 = sphi 0, %s42
      %s46 = sphi 0, %s45
      %s62 = sphi 0, %s46
      %s68 = sphi 0, %s70
      %s71 = sphi 0, %s68
      %s72 = sphi 0, %s71
      %s88 = sphi 0, %s72
      %s94 = sphi 0, %s96
      %s97 = sphi 0, %s94
      %s98 = sphi 0, %s97
      %s114 = sphi 0, %s98
      %s120 = sphi 0, %s122
      %s123 = sphi 0, %s120
      %s124 = sphi 0, %s123
      %s140 = sphi 0, %s124
      %s144 = sphi 0, %s144
      %s146 = sphi 0, %s144
      %s147 = sphi 0, %s146
      %s161 = sphi 0, %s147
      %s165 = sphi 0, %s165
      %s167 = sphi 0, %s165
      %s168 = sphi 0, %s167
      %s182 = sphi 0, %s168
      %s186 = sphi 0, %s186
      %s188 = sphi 0, %s186
      %s189 = sphi 0, %s188
      %s203 = sphi 0, %s189
      %s207 = sphi 0, %s207
      %s209 = sphi 0, %s207
      %s210 = sphi 0, %s209
      %s224 = sphi 0, %s210
      %s228 = sphi 0, %s228
      %s230 = sphi 0, %s228
      %s231 = sphi 0, %s230
      %s245 = sphi 0, %s231
      %s249 = sphi 0, %s249
      %s251 = sphi 0, %s249
      %s252 = sphi 0, %s251
      %s266 = sphi 0, %s252
      %s270 = sphi 0, %s270
      %s272 = sphi 0, %s270
      %s273 = sphi 0, %s272
      %s287 = sphi 0, %s273
      %s291 = sphi 0, %s291
      %s293 = sphi 0, %s291
      %s294 = sphi 0, %s293
      %s308 = sphi 0, %s294
      %s312 = sphi 0, %s312
      %s314 = sphi 0, %s312
      %s315 = sphi 0, %s314
      %s329 = sphi 0, %s315
      %s333 = sphi 0, %s333
      %s335 = sphi 0, %s333
      %s336 = sphi 0, %s335
      %s350 = sphi 0, %s336
      %s354 = sphi 0, %s354
      %s356 = sphi 0, %s354
      %s357 = sphi 0, %s356
      %s371 = sphi 0, %s357
      %s375 = sphi 0, %s375
      %s377 = sphi 0, %s375
      %s378 = sphi 0, %s377
      %s392 = sphi 0, %s378
      %s396 = sphi 0, %s396
      %s398 = sphi 0, %s396
      %s399 = sphi 0, %s398
      %s413 = sphi 0, %s399
      %s419 = sphi 0, %s421
      %s422 = sphi 0, %s419
      %s423 = sphi 0, %s422
      %s439 = sphi 0, %s423
    $region4: #{tpu_custom_call.1} parent=1 // loop_header_branch
      %35 = sbr.rel (%p33) target = $region8
    $region5: #{tpu_custom_call.1} parent=1 // loop_body
      %s37 = ssub.s32 %s32, 1
      %s38 = ssub.s32 %s32, 2
      %s39 = sadd.s32 %s32, 1
      %s40 = ssub.s32 %s32, %s39
      %p41 = scmp.eq.s32.totalorder %s40, 0
      %s43 = sadd.s32 %s42, 1
      %s44 = scalar_select %p41, %s42, %s43
      %p47 = pneg %p41
      %p48 = scmp.eq.s32.totalorder %s32, 1
      %p49 = por %p47, %p48
      %p50 = scmp.ne.s32.totalorder %s42, %s45
      %p51 = scmp.eq.s32.totalorder %s32, 0
      %p52 = por %p50, %p51
      %p53 = scmp.ne.s32.totalorder %s42, %s45
      %p54 = scmp.eq.s32.totalorder %s37, 1
      %p55 = por %p53, %p54
      %p56 = scmp.ne.s32.totalorder %s45, %s46
      %p57 = scmp.eq.s32.totalorder %s37, 0
      %p58 = por %p56, %p57
      %p59 = scmp.ne.s32.totalorder %s45, %s46
      %p60 = scmp.eq.s32.totalorder %s38, 1
      %p61 = por %p59, %p60
      %p63 = scmp.ne.s32.totalorder %s46, %s62
      %p64 = scmp.eq.s32.totalorder %s38, 0
      %p65 = por %p63, %p64
      %s66 = ssub.s32 %s32, %s39
      %p67 = scmp.eq.s32.totalorder %s66, 0
      %s69 = sadd.s32 %s68, 1
      %s70 = scalar_select %p67, %s68, %s69
      %p73 = pneg %p67
      %p74 = scmp.eq.s32.totalorder %s32, 1
      %p75 = por %p73, %p74
      %p76 = scmp.ne.s32.totalorder %s68, %s71
      %p77 = scmp.eq.s32.totalorder %s32, 0
      %p78 = por %p76, %p77
      %p79 = scmp.ne.s32.totalorder %s68, %s71
      %p80 = scmp.eq.s32.totalorder %s37, 1
      %p81 = por %p79, %p80
      %p82 = scmp.ne.s32.totalorder %s71, %s72
      %p83 = scmp.eq.s32.totalorder %s37, 0
      %p84 = por %p82, %p83
      %p85 = scmp.ne.s32.totalorder %s71, %s72
      %p86 = scmp.eq.s32.totalorder %s38, 1
      %p87 = por %p85, %p86
      %p89 = scmp.ne.s32.totalorder %s72, %s88
      %p90 = scmp.eq.s32.totalorder %s38, 0
      %p91 = por %p89, %p90
      %s92 = ssub.s32 %s32, %s39
      %p93 = scmp.eq.s32.totalorder %s92, 0
      %s95 = sadd.s32 %s94, 1
      %s96 = scalar_select %p93, %s94, %s95
      %p99 = pneg %p93
      %p100 = scmp.eq.s32.totalorder %s32, 1
      %p101 = por %p99, %p100
      %p102 = scmp.ne.s32.totalorder %s94, %s97
      %p103 = scmp.eq.s32.totalorder %s32, 0
      %p104 = por %p102, %p103
      %p105 = scmp.ne.s32.totalorder %s94, %s97
      %p106 = scmp.eq.s32.totalorder %s37, 1
      %p107 = por %p105, %p106
      %p108 = scmp.ne.s32.totalorder %s97, %s98
      %p109 = scmp.eq.s32.totalorder %s37, 0
      %p110 = por %p108, %p109
      %p111 = scmp.ne.s32.totalorder %s97, %s98
      %p112 = scmp.eq.s32.totalorder %s38, 1
      %p113 = por %p111, %p112
      %p115 = scmp.ne.s32.totalorder %s98, %s114
      %p116 = scmp.eq.s32.totalorder %s38, 0
      %p117 = por %p115, %p116
      %s118 = ssub.s32 %s32, %s39
      %p119 = scmp.eq.s32.totalorder %s118, 0
      %s121 = sadd.s32 %s120, 1
      %s122 = scalar_select %p119, %s120, %s121
      %p125 = pneg %p119
      %p126 = scmp.eq.s32.totalorder %s32, 1
      %p127 = por %p125, %p126
      %p128 = scmp.ne.s32.totalorder %s120, %s123
      %p129 = scmp.eq.s32.totalorder %s32, 0
      %p130 = por %p128, %p129
      %p131 = scmp.ne.s32.totalorder %s120, %s123
      %p132 = scmp.eq.s32.totalorder %s37, 1
      %p133 = por %p131, %p132
      %p134 = scmp.ne.s32.totalorder %s123, %s124
      %p135 = scmp.eq.s32.totalorder %s37, 0
      %p136 = por %p134, %p135
      %p137 = scmp.ne.s32.totalorder %s123, %s124
      %p138 = scmp.eq.s32.totalorder %s38, 1
      %p139 = por %p137, %p138
      %p141 = scmp.ne.s32.totalorder %s124, %s140
      %p142 = scmp.eq.s32.totalorder %s38, 0
      %p143 = por %p141, %p142
      %s145 = sadd.s32 %s144, 1
      %p148 = scmp.eq.s32.totalorder %s32, 1
      %p149 = scmp.ne.s32.totalorder %s144, %s146
      %p150 = scmp.eq.s32.totalorder %s32, 0
      %p151 = por %p149, %p150
      %p152 = scmp.ne.s32.totalorder %s144, %s146
      %p153 = scmp.eq.s32.totalorder %s37, 1
      %p154 = por %p152, %p153
      %p155 = scmp.ne.s32.totalorder %s146, %s147
      %p156 = scmp.eq.s32.totalorder %s37, 0
      %p157 = por %p155, %p156
      %p158 = scmp.ne.s32.totalorder %s146, %s147
      %p159 = scmp.eq.s32.totalorder %s38, 1
      %p160 = por %p158, %p159
      %p162 = scmp.ne.s32.totalorder %s147, %s161
      %p163 = scmp.eq.s32.totalorder %s38, 0
      %p164 = por %p162, %p163
      %s166 = sadd.s32 %s165, 1
      %p169 = scmp.eq.s32.totalorder %s32, 1
      %p170 = scmp.ne.s32.totalorder %s165, %s167
      %p171 = scmp.eq.s32.totalorder %s32, 0
      %p172 = por %p170, %p171
      %p173 = scmp.ne.s32.totalorder %s165, %s167
      %p174 = scmp.eq.s32.totalorder %s37, 1
      %p175 = por %p173, %p174
      %p176 = scmp.ne.s32.totalorder %s167, %s168
      %p177 = scmp.eq.s32.totalorder %s37, 0
      %p178 = por %p176, %p177
      %p179 = scmp.ne.s32.totalorder %s167, %s168
      %p180 = scmp.eq.s32.totalorder %s38, 1
      %p181 = por %p179, %p180
      %p183 = scmp.ne.s32.totalorder %s168, %s182
      %p184 = scmp.eq.s32.totalorder %s38, 0
      %p185 = por %p183, %p184
      %s187 = sadd.s32 %s186, 1
      %p190 = scmp.eq.s32.totalorder %s32, 1
      %p191 = scmp.ne.s32.totalorder %s186, %s188
      %p192 = scmp.eq.s32.totalorder %s32, 0
      %p193 = por %p191, %p192
      %p194 = scmp.ne.s32.totalorder %s186, %s188
      %p195 = scmp.eq.s32.totalorder %s37, 1
      %p196 = por %p194, %p195
      %p197 = scmp.ne.s32.totalorder %s188, %s189
      %p198 = scmp.eq.s32.totalorder %s37, 0
      %p199 = por %p197, %p198
      %p200 = scmp.ne.s32.totalorder %s188, %s189
      %p201 = scmp.eq.s32.totalorder %s38, 1
      %p202 = por %p200, %p201
      %p204 = scmp.ne.s32.totalorder %s189, %s203
      %p205 = scmp.eq.s32.totalorder %s38, 0
      %p206 = por %p204, %p205
      %s208 = sadd.s32 %s207, 1
      %p211 = scmp.eq.s32.totalorder %s32, 1
      %p212 = scmp.ne.s32.totalorder %s207, %s209
      %p213 = scmp.eq.s32.totalorder %s32, 0
      %p214 = por %p212, %p213
      %p215 = scmp.ne.s32.totalorder %s207, %s209
      %p216 = scmp.eq.s32.totalorder %s37, 1
      %p217 = por %p215, %p216
      %p218 = scmp.ne.s32.totalorder %s209, %s210
      %p219 = scmp.eq.s32.totalorder %s37, 0
      %p220 = por %p218, %p219
      %p221 = scmp.ne.s32.totalorder %s209, %s210
      %p222 = scmp.eq.s32.totalorder %s38, 1
      %p223 = por %p221, %p222
      %p225 = scmp.ne.s32.totalorder %s210, %s224
      %p226 = scmp.eq.s32.totalorder %s38, 0
      %p227 = por %p225, %p226
      %s229 = sadd.s32 %s228, 1
      %p232 = scmp.eq.s32.totalorder %s32, 1
      %p233 = scmp.ne.s32.totalorder %s228, %s230
      %p234 = scmp.eq.s32.totalorder %s32, 0
      %p235 = por %p233, %p234
      %p236 = scmp.ne.s32.totalorder %s228, %s230
      %p237 = scmp.eq.s32.totalorder %s37, 1
      %p238 = por %p236, %p237
      %p239 = scmp.ne.s32.totalorder %s230, %s231
      %p240 = scmp.eq.s32.totalorder %s37, 0
      %p241 = por %p239, %p240
      %p242 = scmp.ne.s32.totalorder %s230, %s231
      %p243 = scmp.eq.s32.totalorder %s38, 1
      %p244 = por %p242, %p243
      %p246 = scmp.ne.s32.totalorder %s231, %s245
      %p247 = scmp.eq.s32.totalorder %s38, 0
      %p248 = por %p246, %p247
      %s250 = sadd.s32 %s249, 1
      %p253 = scmp.eq.s32.totalorder %s32, 1
      %p254 = scmp.ne.s32.totalorder %s249, %s251
      %p255 = scmp.eq.s32.totalorder %s32, 0
      %p256 = por %p254, %p255
      %p257 = scmp.ne.s32.totalorder %s249, %s251
      %p258 = scmp.eq.s32.totalorder %s37, 1
      %p259 = por %p257, %p258
      %p260 = scmp.ne.s32.totalorder %s251, %s252
      %p261 = scmp.eq.s32.totalorder %s37, 0
      %p262 = por %p260, %p261
      %p263 = scmp.ne.s32.totalorder %s251, %s252
      %p264 = scmp.eq.s32.totalorder %s38, 1
      %p265 = por %p263, %p264
      %p267 = scmp.ne.s32.totalorder %s252, %s266
      %p268 = scmp.eq.s32.totalorder %s38, 0
      %p269 = por %p267, %p268
      %s271 = sadd.s32 %s270, 1
      %p274 = scmp.eq.s32.totalorder %s32, 1
      %p275 = scmp.ne.s32.totalorder %s270, %s272
      %p276 = scmp.eq.s32.totalorder %s32, 0
      %p277 = por %p275, %p276
      %p278 = scmp.ne.s32.totalorder %s270, %s272
      %p279 = scmp.eq.s32.totalorder %s37, 1
      %p280 = por %p278, %p279
      %p281 = scmp.ne.s32.totalorder %s272, %s273
      %p282 = scmp.eq.s32.totalorder %s37, 0
      %p283 = por %p281, %p282
      %p284 = scmp.ne.s32.totalorder %s272, %s273
      %p285 = scmp.eq.s32.totalorder %s38, 1
      %p286 = por %p284, %p285
      %p288 = scmp.ne.s32.totalorder %s273, %s287
      %p289 = scmp.eq.s32.totalorder %s38, 0
      %p290 = por %p288, %p289
      %s292 = sadd.s32 %s291, 1
      %p295 = scmp.eq.s32.totalorder %s32, 1
      %p296 = scmp.ne.s32.totalorder %s291, %s293
      %p297 = scmp.eq.s32.totalorder %s32, 0
      %p298 = por %p296, %p297
      %p299 = scmp.ne.s32.totalorder %s291, %s293
      %p300 = scmp.eq.s32.totalorder %s37, 1
      %p301 = por %p299, %p300
      %p302 = scmp.ne.s32.totalorder %s293, %s294
      %p303 = scmp.eq.s32.totalorder %s37, 0
      %p304 = por %p302, %p303
      %p305 = scmp.ne.s32.totalorder %s293, %s294
      %p306 = scmp.eq.s32.totalorder %s38, 1
      %p307 = por %p305, %p306
      %p309 = scmp.ne.s32.totalorder %s294, %s308
      %p310 = scmp.eq.s32.totalorder %s38, 0
      %p311 = por %p309, %p310
      %s313 = sadd.s32 %s312, 1
      %p316 = scmp.eq.s32.totalorder %s32, 1
      %p317 = scmp.ne.s32.totalorder %s312, %s314
      %p318 = scmp.eq.s32.totalorder %s32, 0
      %p319 = por %p317, %p318
      %p320 = scmp.ne.s32.totalorder %s312, %s314
      %p321 = scmp.eq.s32.totalorder %s37, 1
      %p322 = por %p320, %p321
      %p323 = scmp.ne.s32.totalorder %s314, %s315
      %p324 = scmp.eq.s32.totalorder %s37, 0
      %p325 = por %p323, %p324
      %p326 = scmp.ne.s32.totalorder %s314, %s315
      %p327 = scmp.eq.s32.totalorder %s38, 1
      %p328 = por %p326, %p327
      %p330 = scmp.ne.s32.totalorder %s315, %s329
      %p331 = scmp.eq.s32.totalorder %s38, 0
      %p332 = por %p330, %p331
      %s334 = sadd.s32 %s333, 1
      %p337 = scmp.eq.s32.totalorder %s32, 1
      %p338 = scmp.ne.s32.totalorder %s333, %s335
      %p339 = scmp.eq.s32.totalorder %s32, 0
      %p340 = por %p338, %p339
      %p341 = scmp.ne.s32.totalorder %s333, %s335
      %p342 = scmp.eq.s32.totalorder %s37, 1
      %p343 = por %p341, %p342
      %p344 = scmp.ne.s32.totalorder %s335, %s336
      %p345 = scmp.eq.s32.totalorder %s37, 0
      %p346 = por %p344, %p345
      %p347 = scmp.ne.s32.totalorder %s335, %s336
      %p348 = scmp.eq.s32.totalorder %s38, 1
      %p349 = por %p347, %p348
      %p351 = scmp.ne.s32.totalorder %s336, %s350
      %p352 = scmp.eq.s32.totalorder %s38, 0
      %p353 = por %p351, %p352
      %s355 = sadd.s32 %s354, 1
      %p358 = scmp.eq.s32.totalorder %s32, 1
      %p359 = scmp.ne.s32.totalorder %s354, %s356
      %p360 = scmp.eq.s32.totalorder %s32, 0
      %p361 = por %p359, %p360
      %p362 = scmp.ne.s32.totalorder %s354, %s356
      %p363 = scmp.eq.s32.totalorder %s37, 1
      %p364 = por %p362, %p363
      %p365 = scmp.ne.s32.totalorder %s356, %s357
      %p366 = scmp.eq.s32.totalorder %s37, 0
      %p367 = por %p365, %p366
      %p368 = scmp.ne.s32.totalorder %s356, %s357
      %p369 = scmp.eq.s32.totalorder %s38, 1
      %p370 = por %p368, %p369
      %p372 = scmp.ne.s32.totalorder %s357, %s371
      %p373 = scmp.eq.s32.totalorder %s38, 0
      %p374 = por %p372, %p373
      %s376 = sadd.s32 %s375, 1
      %p379 = scmp.eq.s32.totalorder %s32, 1
      %p380 = scmp.ne.s32.totalorder %s375, %s377
      %p381 = scmp.eq.s32.totalorder %s32, 0
      %p382 = por %p380, %p381
      %p383 = scmp.ne.s32.totalorder %s375, %s377
      %p384 = scmp.eq.s32.totalorder %s37, 1
      %p385 = por %p383, %p384
      %p386 = scmp.ne.s32.totalorder %s377, %s378
      %p387 = scmp.eq.s32.totalorder %s37, 0
      %p388 = por %p386, %p387
      %p389 = scmp.ne.s32.totalorder %s377, %s378
      %p390 = scmp.eq.s32.totalorder %s38, 1
      %p391 = por %p389, %p390
      %p393 = scmp.ne.s32.totalorder %s378, %s392
      %p394 = scmp.eq.s32.totalorder %s38, 0
      %p395 = por %p393, %p394
      %s397 = sadd.s32 %s396, 1
      %p400 = scmp.eq.s32.totalorder %s32, 1
      %p401 = scmp.ne.s32.totalorder %s396, %s398
      %p402 = scmp.eq.s32.totalorder %s32, 0
      %p403 = por %p401, %p402
      %p404 = scmp.ne.s32.totalorder %s396, %s398
      %p405 = scmp.eq.s32.totalorder %s37, 1
      %p406 = por %p404, %p405
      %p407 = scmp.ne.s32.totalorder %s398, %s399
      %p408 = scmp.eq.s32.totalorder %s37, 0
      %p409 = por %p407, %p408
      %p410 = scmp.ne.s32.totalorder %s398, %s399
      %p411 = scmp.eq.s32.totalorder %s38, 1
      %p412 = por %p410, %p411
      %p414 = scmp.ne.s32.totalorder %s399, %s413
      %p415 = scmp.eq.s32.totalorder %s38, 0
      %p416 = por %p414, %p415
      %s417 = ssub.s32 %s32, %s39
      %p418 = scmp.eq.s32.totalorder %s417, 0
      %s420 = sadd.s32 %s419, 1
      %s421 = scalar_select %p418, %s419, %s420
      %p424 = pneg %p418
      %p425 = scmp.eq.s32.totalorder %s32, 1
      %p426 = por %p424, %p425
      %p427 = scmp.ne.s32.totalorder %s419, %s422
      %p428 = scmp.eq.s32.totalorder %s32, 0
      %p429 = por %p427, %p428
      %p430 = scmp.ne.s32.totalorder %s419, %s422
      %p431 = scmp.eq.s32.totalorder %s37, 1
      %p432 = por %p430, %p431
      %p433 = scmp.ne.s32.totalorder %s422, %s423
      %p434 = scmp.eq.s32.totalorder %s37, 0
      %p435 = por %p433, %p434
      %p436 = scmp.ne.s32.totalorder %s422, %s423
      %p437 = scmp.eq.s32.totalorder %s38, 1
      %p438 = por %p436, %p437
      %p440 = scmp.ne.s32.totalorder %s423, %s439
      %p441 = scmp.eq.s32.totalorder %s38, 0
      %p442 = por %p440, %p441
      %p443 = scmp.le.s32.totalorder 1, %s32
      %p444 = scmp.lt.s32.totalorder %s32, 3
      %p445 = pnand %p443, %p444
      %p446 = pneg %p445
      // Predicated region
      $region9: #{tpu_custom_call.1} parent=5 // pred_check
        _
      $region10: #{tpu_custom_call.1} parent=5 // pred_check_branch
        %448 = sbr.rel (%p445) target = $region12
      $region11: #{tpu_custom_call.1} parent=5 // pred_region
        %s449 = ssub.s32 %s32, 1
        // Predicated region
        $region13: #{tpu_custom_call.1} parent=11 // pred_check
          %p450 = pneg %p157
        $region14: #{tpu_custom_call.1} parent=11 // pred_check_branch
          %452 = sbr.rel (%p450) target = $region16
        $region15: #{tpu_custom_call.1} parent=11 // pred_region
          %s454 = ssub.s32 256, 256
          %455 = vsyncadd [#allocation6], %s454
          %s456 = sshll.u32 [#allocation5], 4
          %s457 = int_to_ptr.vmem [resolvable:$true] %s456
          %462 = dma.hbm_to_vmem [thread:$0]  %s4, 256, %s457, [#allocation6], 64, 64, 4
        $region16: #{tpu_custom_call.1} parent=11 // pred_fallthru
          _
        // Predicated region
        $region17: #{tpu_custom_call.1} parent=11 // pred_check
          %p463 = pneg %p178
        $region18: #{tpu_custom_call.1} parent=11 // pred_check_branch
          %465 = sbr.rel (%p463) target = $region20
        $region19: #{tpu_custom_call.1} parent=11 // pred_region
          %s467 = ssub.s32 256, 256
          %468 = vsyncadd [#allocation6], %s467
          %s469 = sshll.u32 [#allocation7], 4
          %s470 = int_to_ptr.vmem [resolvable:$true] %s469
          %475 = dma.hbm_to_vmem [thread:$0]  %s5, 256, %s470, [#allocation6], 64, 64, 4
        $region20: #{tpu_custom_call.1} parent=11 // pred_fallthru
          _
        // Predicated region
        $region21: #{tpu_custom_call.1} parent=11 // pred_check
          %p476 = pneg %p199
        $region22: #{tpu_custom_call.1} parent=11 // pred_check_branch
          %478 = sbr.rel (%p476) target = $region24
        $region23: #{tpu_custom_call.1} parent=11 // pred_region
          %s480 = ssub.s32 256, 256
          %481 = vsyncadd [#allocation9], %s480
          %s482 = sshll.u32 [#allocation8], 4
          %s483 = int_to_ptr.vmem [resolvable:$true] %s482
          %488 = dma.hbm_to_vmem [thread:$0]  %s6, 256, %s483, [#allocation9], 64, 64, 4
        $region24: #{tpu_custom_call.1} parent=11 // pred_fallthru
          _
        // Predicated region
        $region25: #{tpu_custom_call.1} parent=11 // pred_check
          %p489 = pneg %p220
        $region26: #{tpu_custom_call.1} parent=11 // pred_check_branch
          %491 = sbr.rel (%p489) target = $region28
        $region27: #{tpu_custom_call.1} parent=11 // pred_region
          %s493 = ssub.s32 256, 256
          %494 = vsyncadd [#allocation9], %s493
          %s495 = sshll.u32 [#allocation10], 4
          %s496 = int_to_ptr.vmem [resolvable:$true] %s495
          %501 = dma.hbm_to_vmem [thread:$0]  %s7, 256, %s496, [#allocation9], 64, 64, 4
        $region28: #{tpu_custom_call.1} parent=11 // pred_fallthru
          _
        // Predicated region
        $region29: #{tpu_custom_call.1} parent=11 // pred_check
          %p502 = pneg %p241
        $region30: #{tpu_custom_call.1} parent=11 // pred_check_branch
          %504 = sbr.rel (%p502) target = $region32
        $region31: #{tpu_custom_call.1} parent=11 // pred_region
          _
        $region32: #{tpu_custom_call.1} parent=11 // pred_fallthru
          _
        // Predicated region
        $region33: #{tpu_custom_call.1} parent=11 // pred_check
          %p505 = pneg %p262
        $region34: #{tpu_custom_call.1} parent=11 // pred_check_branch
          %507 = sbr.rel (%p505) target = $region36
        $region35: #{tpu_custom_call.1} parent=11 // pred_region
          _
        $region36: #{tpu_custom_call.1} parent=11 // pred_fallthru
          _
        // Predicated region
        $region37: #{tpu_custom_call.1} parent=11 // pred_check
          %p508 = pneg %p283
        $region38: #{tpu_custom_call.1} parent=11 // pred_check_branch
          %510 = sbr.rel (%p508) target = $region40
        $region39: #{tpu_custom_call.1} parent=11 // pred_region
          _
        $region40: #{tpu_custom_call.1} parent=11 // pred_fallthru
          _
        // Predicated region
        $region41: #{tpu_custom_call.1} parent=11 // pred_check
          %p511 = pneg %p304
        $region42: #{tpu_custom_call.1} parent=11 // pred_check_branch
          %513 = sbr.rel (%p511) target = $region44
        $region43: #{tpu_custom_call.1} parent=11 // pred_region
          %s515 = ssub.s32 256, 256
          %516 = vsyncadd [#allocation12], %s515
          %s517 = sshll.u32 [#allocation11], 4
          %s518 = int_to_ptr.vmem [resolvable:$true] %s517
          %523 = dma.hbm_to_vmem [thread:$0]  %s11, 256, %s518, [#allocation12], 64, 64, 4
        $region44: #{tpu_custom_call.1} parent=11 // pred_fallthru
          _
        // Predicated region
        $region45: #{tpu_custom_call.1} parent=11 // pred_check
          %p524 = pneg %p325
        $region46: #{tpu_custom_call.1} parent=11 // pred_check_branch
          %526 = sbr.rel (%p524) target = $region48
        $region47: #{tpu_custom_call.1} parent=11 // pred_region
          _
        $region48: #{tpu_custom_call.1} parent=11 // pred_fallthru
          _
        // Predicated region
        $region49: #{tpu_custom_call.1} parent=11 // pred_check
          %p527 = pneg %p346
        $region50: #{tpu_custom_call.1} parent=11 // pred_check_branch
          %529 = sbr.rel (%p527) target = $region52
        $region51: #{tpu_custom_call.1} parent=11 // pred_region
          _
        $region52: #{tpu_custom_call.1} parent=11 // pred_fallthru
          _
        // Predicated region
        $region53: #{tpu_custom_call.1} parent=11 // pred_check
          %p530 = pneg %p367
        $region54: #{tpu_custom_call.1} parent=11 // pred_check_branch
          %532 = sbr.rel (%p530) target = $region56
        $region55: #{tpu_custom_call.1} parent=11 // pred_region
          _
        $region56: #{tpu_custom_call.1} parent=11 // pred_fallthru
          _
        // Predicated region
        $region57: #{tpu_custom_call.1} parent=11 // pred_check
          %p533 = pneg %p388
        $region58: #{tpu_custom_call.1} parent=11 // pred_check_branch
          %535 = sbr.rel (%p533) target = $region60
        $region59: #{tpu_custom_call.1} parent=11 // pred_region
          _
        $region60: #{tpu_custom_call.1} parent=11 // pred_fallthru
          _
        // Predicated region
        $region61: #{tpu_custom_call.1} parent=11 // pred_check
          %p536 = pneg %p409
        $region62: #{tpu_custom_call.1} parent=11 // pred_check_branch
          %538 = sbr.rel (%p536) target = $region64
        $region63: #{tpu_custom_call.1} parent=11 // pred_region
          _
        $region64: #{tpu_custom_call.1} parent=11 // pred_fallthru
          _
      $region12: #{tpu_custom_call.1} parent=5 // pred_fallthru
        _
      %p539 = scmp.lt.s32.totalorder %s32, 2
      // Predicated region
      $region65: #{tpu_custom_call.1} parent=5 // pred_check
        %p540 = pneg %p539
      $region66: #{tpu_custom_call.1} parent=5 // pred_check_branch
        %542 = sbr.rel (%p540) target = $region68
      $region67: #{tpu_custom_call.1} parent=5 // pred_region
        // Predicated region
        $region69: #{tpu_custom_call.1} parent=67 // pred_check
          %p543 = pneg %p52
        $region70: #{tpu_custom_call.1} parent=67 // pred_check_branch
          %545 = sbr.rel (%p543) target = $region72
        $region71: #{tpu_custom_call.1} parent=67 // pred_region
          %p546 = scmp.lt.s32.totalorder %s32, 1
          %s547 = scalar_select %p546, %s32, 1
          %s548 = smul.addr %s547, 8
          %s549 = scalar_lea.vmem %s0, %s548
        $region72: #{tpu_custom_call.1} parent=67 // pred_fallthru
          _
        // Predicated region
        $region73: #{tpu_custom_call.1} parent=67 // pred_check
          %p550 = pneg %p78
        $region74: #{tpu_custom_call.1} parent=67 // pred_check_branch
          %552 = sbr.rel (%p550) target = $region76
        $region75: #{tpu_custom_call.1} parent=67 // pred_region
          %p553 = scmp.lt.s32.totalorder %s32, 1
          %s554 = scalar_select %p553, %s32, 1
          %s555 = smul.addr %s554, 8
          %s556 = scalar_lea.vmem %s1, %s555
        $region76: #{tpu_custom_call.1} parent=67 // pred_fallthru
          _
        // Predicated region
        $region77: #{tpu_custom_call.1} parent=67 // pred_check
          %p557 = pneg %p104
        $region78: #{tpu_custom_call.1} parent=67 // pred_check_branch
          %559 = sbr.rel (%p557) target = $region80
        $region79: #{tpu_custom_call.1} parent=67 // pred_region
          %p560 = scmp.lt.s32.totalorder %s32, 1
          %s561 = scalar_select %p560, %s32, 1
          %s562 = smul.addr %s561, 8
          %s563 = scalar_lea.vmem %s2, %s562
        $region80: #{tpu_custom_call.1} parent=67 // pred_fallthru
          _
        // Predicated region
        $region81: #{tpu_custom_call.1} parent=67 // pred_check
          %p564 = pneg %p130
        $region82: #{tpu_custom_call.1} parent=67 // pred_check_branch
          %566 = sbr.rel (%p564) target = $region84
        $region83: #{tpu_custom_call.1} parent=67 // pred_region
          %s567 = sand.u32 %s120, 1
          %s568 = scalar_lea.sflag [#allocation3], %s567
          %s569 = sand.u32 %s120, 1
          %s570 = smul.addr %s569, 4
          %s571 = scalar_lea.vmem [#allocation2], %s570
          %s573 = ssub.s32 64, 64
          %574 = vsyncadd %s568, %s573
          %s575 = smul.addr %s32, 64
          %s576 = scalar_lea.hbm %s3, %s575
          %s578 = sshll.u32 %s571, 4
          %s579 = int_to_ptr.vmem [resolvable:$true] %s578
          %581 = dma.hbm_to_vmem [thread:$0]  %s576, 64, %s579, %s568
        $region84: #{tpu_custom_call.1} parent=67 // pred_fallthru
          _
      $region68: #{tpu_custom_call.1} parent=5 // pred_fallthru
        _
      %p582 = scmp.le.s32.totalorder 1, %s32
      %p583 = scmp.lt.s32.totalorder %s32, 3
      %p584 = pnand %p582, %p583
      %p585 = pneg %p584
      // Predicated region
      $region85: #{tpu_custom_call.1} parent=5 // pred_check
        _
      $region86: #{tpu_custom_call.1} parent=5 // pred_check_branch
        %587 = sbr.rel (%p584) target = $region88
      $region87: #{tpu_custom_call.1} parent=5 // pred_region
        %s588 = ssub.s32 %s32, 1
        %s589 = sand.u32 %s123, 1
        %s590 = scalar_lea.sflag [#allocation3], %s589
        %s591 = sand.u32 %s123, 1
        %s592 = smul.addr %s591, 4
        %s593 = scalar_lea.vmem [#allocation2], %s592
        // Predicated region
        $region89: #{tpu_custom_call.1} parent=87 // pred_check
          %p594 = pneg %p136
        $region90: #{tpu_custom_call.1} parent=87 // pred_check_branch
          %596 = sbr.rel (%p594) target = $region92
        $region91: #{tpu_custom_call.1} parent=87 // pred_region
          %597 = dma.done %s590, 64
        $region92: #{tpu_custom_call.1} parent=87 // pred_fallthru
          _
        // Predicated region
        $region93: #{tpu_custom_call.1} parent=87 // pred_check
          %p598 = pneg %p157
        $region94: #{tpu_custom_call.1} parent=87 // pred_check_branch
          %600 = sbr.rel (%p598) target = $region96
        $region95: #{tpu_custom_call.1} parent=87 // pred_region
          %601 = dma.done [#allocation6], 256
        $region96: #{tpu_custom_call.1} parent=87 // pred_fallthru
          _
        // Predicated region
        $region97: #{tpu_custom_call.1} parent=87 // pred_check
          %p602 = pneg %p178
        $region98: #{tpu_custom_call.1} parent=87 // pred_check_branch
          %604 = sbr.rel (%p602) target = $region100
        $region99: #{tpu_custom_call.1} parent=87 // pred_region
          %605 = dma.done [#allocation6], 256
        $region100: #{tpu_custom_call.1} parent=87 // pred_fallthru
          _
        // Predicated region
        $region101: #{tpu_custom_call.1} parent=87 // pred_check
          %p606 = pneg %p199
        $region102: #{tpu_custom_call.1} parent=87 // pred_check_branch
          %608 = sbr.rel (%p606) target = $region104
        $region103: #{tpu_custom_call.1} parent=87 // pred_region
          %609 = dma.done [#allocation9], 256
        $region104: #{tpu_custom_call.1} parent=87 // pred_fallthru
          _
        // Predicated region
        $region105: #{tpu_custom_call.1} parent=87 // pred_check
          %p610 = pneg %p220
        $region106: #{tpu_custom_call.1} parent=87 // pred_check_branch
          %612 = sbr.rel (%p610) target = $region108
        $region107: #{tpu_custom_call.1} parent=87 // pred_region
          %613 = dma.done [#allocation9], 256
        $region108: #{tpu_custom_call.1} parent=87 // pred_fallthru
          _
        // Predicated region
        $region109: #{tpu_custom_call.1} parent=87 // pred_check
          %p614 = pneg %p304
        $region110: #{tpu_custom_call.1} parent=87 // pred_check_branch
          %616 = sbr.rel (%p614) target = $region112
        $region111: #{tpu_custom_call.1} parent=87 // pred_region
          %617 = dma.done [#allocation12], 256
        $region112: #{tpu_custom_call.1} parent=87 // pred_fallthru
          _
        %p618 = scmp.lt.s32.totalorder %s37, 1
        %s619 = scalar_select %p618, %s37, 1
        %s620 = smul.addr %s619, 8
        %s621 = scalar_lea.vmem %s0, %s620
        %p622 = pneg %p58
        %p623 = pneg %p55
        %p624 = scmp.lt.s32.totalorder %s37, 1
        %s625 = scalar_select %p624, %s37, 1
        %s626 = smul.addr %s625, 8
        %s627 = scalar_lea.vmem %s1, %s626
        %p628 = pneg %p84
        %p629 = pneg %p81
        %p630 = scmp.lt.s32.totalorder %s37, 1
        %s631 = scalar_select %p630, %s37, 1
        %s632 = smul.addr %s631, 8
        %s633 = scalar_lea.vmem %s2, %s632
        %p634 = pneg %p110
        %p635 = pneg %p107
        %s636 = sand.u32 %s123, 1
        %s637 = scalar_lea.sflag [#allocation3], %s636
        %s638 = sand.u32 %s123, 1
        %s639 = smul.addr %s638, 4
        %s640 = scalar_lea.vmem [#allocation2], %s639
        %p641 = pneg %p136
        %p642 = pneg %p133
        %p643 = pneg %p157
        %p644 = pneg %p154
        %p645 = pneg %p178
        %p646 = pneg %p175
        %p647 = pneg %p199
        %p648 = pneg %p196
        %p649 = pneg %p220
        %p650 = pneg %p217
        %p651 = pneg %p241
        %p652 = pneg %p238
        %p653 = pneg %p262
        %p654 = pneg %p259
        %p655 = pneg %p283
        %p656 = pneg %p280
        %p657 = pneg %p304
        %p658 = pneg %p301
        %p659 = pneg %p325
        %p660 = pneg %p322
        %p661 = pneg %p346
        %p662 = pneg %p343
        %p663 = pneg %p367
        %p664 = pneg %p364
        %p665 = pneg %p388
        %p666 = pneg %p385
        %p667 = pneg %p409
        %p668 = pneg %p406
        %p669 = pneg %p435
        %p670 = pneg %p432
        %s671 = sand.u32 %s422, 1
        %s672 = scalar_lea.sflag [#allocation4], %s671
        %s673 = sand.u32 %s422, 1
        %s674 = smul.addr %s673, 8
        %s675 = scalar_lea.vmem [#allocation13], %s674
        %p676 = scmp.lt.s32.totalorder %s37, 1
        %s677 = scalar_select %p676, %s37, 1
        %s678 = smul.addr %s677, 8
        %s679 = scalar_lea.vmem %s0, %s678
        %p680 = scmp.lt.s32.totalorder %s37, 1
        %s681 = scalar_select %p680, %s37, 1
        %s682 = smul.addr %s681, 8
        %s683 = scalar_lea.vmem %s1, %s682
        %p684 = scmp.lt.s32.totalorder %s37, 1
        %s685 = scalar_select %p684, %s37, 1
        %s686 = smul.addr %s685, 8
        %s687 = scalar_lea.vmem %s2, %s686
        %v691 = vld [vmem:[%s679] sm:$0xff]
        %v692 = vpack.c.bf16 %v691, %v691
        %v693 = vld [vmem:[%s683] sm:$0xff]
        %v694 = vpack.c.bf16 %v693, %v693
        %v695 = vld [vmem:[%s687] sm:$0xff]
        %v696 = vpack.c.bf16 %v695, %v695
        %v697 = vld [vmem:[%s593] sm:$0xf]
        %v698 = vld [vmem:[#allocation5] sm:$0xf]
        %v699 = vld [vmem:[#allocation5 + $0x4] sm:$0xf]
        %v700 = vld [vmem:[#allocation5 + $0x8] sm:$0xf]
        %v701 = vld [vmem:[#allocation5 + $0xc] sm:$0xf]
        %v706 = vunpack.c.l.b16 %v698
        %v707 = vunpack.c.l.b16 %v699
        %v708 = vunpack.c.l.b16 %v700
        %v709 = vunpack.c.l.b16 %v701
        %v710 = vpack.c.b16 %v707, %v706
        %v711 = vpack.c.b16 %v709, %v708
        %vm714 = vcmask 261120
        %v716 = vsel %vm714, %v692, 0
        %718 = vmatprep.subr.bf16.mxu0 0
        %719 = vmatpush1.bf16.msra.mxu0 0
        %720 = vmatprep.subr.bf16.mxu0 0
        %721 = vmatpush1.bf16.msra.mxu0 0
        %722 = vmatprep.subr.bf16.mxu0 0
        %723 = vmatpush1.bf16.msra.mxu0 0
        %724 = vmatprep.subr.bf16.mxu0 0
        %725 = vmatpush1.bf16.msra.mxu0 0
        %726 = vmatprep.subr.bf16.mxu0 0
        %727 = vmatpush1.bf16.msra.mxu0 0
        %728 = vmatprep.subr.bf16.mxu0 0
        %729 = vmatpush1.bf16.msra.mxu0 0
        %730 = vmatprep.subr.bf16.mxu0 0
        %731 = vmatpush1.bf16.msra.mxu0 %v711
        %732 = vmatprep.subr.bf16.mxu0 0
        %733 = vmatpush1.bf16.msra.mxu0 %v710
        %734 = vmatprep.subr.bf16.mxu0 0
        %735 = vmatpush2.bf16.msra.mxu0 0
        %736 = vmatprep.subr.bf16.mxu0 0
        %737 = vmatpush2.bf16.msra.mxu0 0
        %738 = vmatprep.subr.bf16.mxu0 0
        %739 = vmatpush2.bf16.msra.mxu0 0
        %740 = vmatprep.subr.bf16.mxu0 0
        %741 = vmatpush2.bf16.msra.mxu0 0
        %742 = vmatprep.subr.bf16.mxu0 0
        %743 = vmatpush2.bf16.msra.mxu0 0
        %744 = vmatprep.subr.bf16.mxu0 0
        %745 = vmatpush2.bf16.msra.mxu0 0
        %746 = vmatprep.subr.bf16.mxu0 0
        %747 = vmatpush2.bf16.msra.mxu0 0
        %748 = vmatprep.subr.bf16.mxu0 0
        %749 = vmatpush2.bf16.msra.mxu0 0
        %750 = vmatprep.mubr.bf16.mxu0 0
        %751 = vmatmul.mubr.bf16.gmra.mxu0 %v716
        %v752 = vpop.f32.mrf.mxu0
        %v753 = vadd.f32 0.0, %v752
        %v754 = vpop.f32.mrf.mxu0
        %v755 = vpop.f32.mrf.mxu0
        %v756 = vpop.f32.mrf.mxu0
        %757 = vdwg.mxu0
        %v758 = vld [vmem:[#allocation7] sm:$0xf]
        %v759 = vld [vmem:[#allocation7 + $0x4] sm:$0xf]
        %v760 = vld [vmem:[#allocation7 + $0x8] sm:$0xf]
        %v761 = vld [vmem:[#allocation7 + $0xc] sm:$0xf]
        %v766 = vunpack.c.l.b16 %v758
        %v767 = vunpack.c.l.b16 %v759
        %v768 = vunpack.c.l.b16 %v760
        %v769 = vunpack.c.l.b16 %v761
        %v770 = vpack.c.b16 %v767, %v766
        %v771 = vpack.c.b16 %v769, %v768
        %v775 = vsel %vm714, %v694, 0
        %777 = vmatprep.subr.bf16.mxu0 0
        %778 = vmatpush1.bf16.msra.mxu0 0
        %779 = vmatprep.subr.bf16.mxu0 0
        %780 = vmatpush1.bf16.msra.mxu0 0
        %781 = vmatprep.subr.bf16.mxu0 0
        %782 = vmatpush1.bf16.msra.mxu0 0
        %783 = vmatprep.subr.bf16.mxu0 0
        %784 = vmatpush1.bf16.msra.mxu0 0
        %785 = vmatprep.subr.bf16.mxu0 0
        %786 = vmatpush1.bf16.msra.mxu0 0
        %787 = vmatprep.subr.bf16.mxu0 0
        %788 = vmatpush1.bf16.msra.mxu0 0
        %789 = vmatprep.subr.bf16.mxu0 0
        %790 = vmatpush1.bf16.msra.mxu0 %v771
        %791 = vmatprep.subr.bf16.mxu0 0
        %792 = vmatpush1.bf16.msra.mxu0 %v770
        %793 = vmatprep.subr.bf16.mxu0 0
        %794 = vmatpush2.bf16.msra.mxu0 0
        %795 = vmatprep.subr.bf16.mxu0 0
        %796 = vmatpush2.bf16.msra.mxu0 0
        %797 = vmatprep.subr.bf16.mxu0 0
        %798 = vmatpush2.bf16.msra.mxu0 0
        %799 = vmatprep.subr.bf16.mxu0 0
        %800 = vmatpush2.bf16.msra.mxu0 0
        %801 = vmatprep.subr.bf16.mxu0 0
        %802 = vmatpush2.bf16.msra.mxu0 0
        %803 = vmatprep.subr.bf16.mxu0 0
        %804 = vmatpush2.bf16.msra.mxu0 0
        %805 = vmatprep.subr.bf16.mxu0 0
        %806 = vmatpush2.bf16.msra.mxu0 0
        %807 = vmatprep.subr.bf16.mxu0 0
        %808 = vmatpush2.bf16.msra.mxu0 0
        %809 = vmatprep.mubr.bf16.mxu0 0
        %810 = vmatmul.mubr.bf16.gmra.mxu0 %v775
        %v811 = vpop.f32.mrf.mxu0
        %v812 = vadd.f32 0.0, %v811
        %v813 = vpop.f32.mrf.mxu0
        %v814 = vpop.f32.mrf.mxu0
        %v815 = vpop.f32.mrf.mxu0
        %816 = vdwg.mxu0
        %v817 = vld [vmem:[#allocation8] sm:$0xf]
        %v818 = vld [vmem:[#allocation8 + $0x4] sm:$0xf]
        %v819 = vld [vmem:[#allocation8 + $0x8] sm:$0xf]
        %v820 = vld [vmem:[#allocation8 + $0xc] sm:$0xf]
        %v825 = vunpack.c.l.b16 %v817
        %v826 = vunpack.c.l.b16 %v818
        %v827 = vunpack.c.l.b16 %v819
        %v828 = vunpack.c.l.b16 %v820
        %v829 = vpack.c.b16 %v826, %v825
        %v830 = vpack.c.b16 %v828, %v827
        %v834 = vsel %vm714, %v696, 0
        %836 = vmatprep.subr.bf16.mxu0 0
        %837 = vmatpush1.bf16.msra.mxu0 0
        %838 = vmatprep.subr.bf16.mxu0 0
        %839 = vmatpush1.bf16.msra.mxu0 0
        %840 = vmatprep.subr.bf16.mxu0 0
        %841 = vmatpush1.bf16.msra.mxu0 0
        %842 = vmatprep.subr.bf16.mxu0 0
        %843 = vmatpush1.bf16.msra.mxu0 0
        %844 = vmatprep.subr.bf16.mxu0 0
        %845 = vmatpush1.bf16.msra.mxu0 0
        %846 = vmatprep.subr.bf16.mxu0 0
        %847 = vmatpush1.bf16.msra.mxu0 0
        %848 = vmatprep.subr.bf16.mxu0 0
        %849 = vmatpush1.bf16.msra.mxu0 %v830
        %850 = vmatprep.subr.bf16.mxu0 0
        %851 = vmatpush1.bf16.msra.mxu0 %v829
        %852 = vmatprep.subr.bf16.mxu0 0
        %853 = vmatpush2.bf16.msra.mxu0 0
        %854 = vmatprep.subr.bf16.mxu0 0
        %855 = vmatpush2.bf16.msra.mxu0 0
        %856 = vmatprep.subr.bf16.mxu0 0
        %857 = vmatpush2.bf16.msra.mxu0 0
        %858 = vmatprep.subr.bf16.mxu0 0
        %859 = vmatpush2.bf16.msra.mxu0 0
        %860 = vmatprep.subr.bf16.mxu0 0
        %861 = vmatpush2.bf16.msra.mxu0 0
        %862 = vmatprep.subr.bf16.mxu0 0
        %863 = vmatpush2.bf16.msra.mxu0 0
        %864 = vmatprep.subr.bf16.mxu0 0
        %865 = vmatpush2.bf16.msra.mxu0 0
        %866 = vmatprep.subr.bf16.mxu0 0
        %867 = vmatpush2.bf16.msra.mxu0 0
        %868 = vmatprep.mubr.bf16.mxu0 0
        %869 = vmatmul.mubr.bf16.gmra.mxu0 %v834
        %v870 = vpop.f32.mrf.mxu0
        %v871 = vadd.f32 0.0, %v870
        %v872 = vpop.f32.mrf.mxu0
        %v873 = vpop.f32.mrf.mxu0
        %v874 = vpop.f32.mrf.mxu0
        %875 = vdwg.mxu0
        %v876 = vpack.c.bf16 %v753, %v753
        %v877 = vpack.c.bf16 %v812, %v812
        %v878 = vpack.c.bf16 %v871, %v871
        %vm879 = vcmask 64512
        %v881 = vsel %vm879, %v876, 0
        %v884 = vsel %vm879, %v877, 0
        %886 = vmatprep.subr.bf16.mxu0 0
        %887 = vmatpush1.bf16.xpose.msra.mxu0 0
        %888 = vmatprep.subr.bf16.mxu0 0
        %889 = vmatpush1.bf16.xpose.msra.mxu0 0
        %890 = vmatprep.subr.bf16.mxu0 0
        %891 = vmatpush1.bf16.xpose.msra.mxu0 0
        %892 = vmatprep.subr.bf16.mxu0 0
        %893 = vmatpush1.bf16.xpose.msra.mxu0 0
        %894 = vmatprep.subr.bf16.mxu0 0
        %895 = vmatpush1.bf16.xpose.msra.mxu0 0
        %896 = vmatprep.subr.bf16.mxu0 0
        %897 = vmatpush1.bf16.xpose.msra.mxu0 0
        %898 = vmatprep.subr.bf16.mxu0 0
        %899 = vmatpush1.bf16.xpose.msra.mxu0 0
        %900 = vmatprep.subr.bf16.mxu0 0
        %901 = vmatpush1.bf16.xpose.msra.mxu0 %v884
        %902 = vmatprep.subr.bf16.mxu0 0
        %903 = vmatpush2.bf16.xpose.msra.mxu0 0
        %904 = vmatprep.subr.bf16.mxu0 0
        %905 = vmatpush2.bf16.xpose.msra.mxu0 0
        %906 = vmatprep.subr.bf16.mxu0 0
        %907 = vmatpush2.bf16.xpose.msra.mxu0 0
        %908 = vmatprep.subr.bf16.mxu0 0
        %909 = vmatpush2.bf16.xpose.msra.mxu0 0
        %910 = vmatprep.subr.bf16.mxu0 0
        %911 = vmatpush2.bf16.xpose.msra.mxu0 0
        %912 = vmatprep.subr.bf16.mxu0 0
        %913 = vmatpush2.bf16.xpose.msra.mxu0 0
        %914 = vmatprep.subr.bf16.mxu0 0
        %915 = vmatpush2.bf16.xpose.msra.mxu0 0
        %916 = vmatprep.subr.bf16.mxu0 0
        %917 = vmatpush2.bf16.xpose.msra.mxu0 0
        %918 = vmatprep.mubr.bf16.mxu0 0
        %919 = vmatmul.mubr.bf16.gmra.mxu0 %v881
        %v920 = vpop.f32.mrf.mxu0
        %v921 = vadd.f32 0.0, %v920
        %v922 = vpop.f32.mrf.mxu0
        %v923 = vpop.f32.mrf.mxu0
        %v924 = vpop.f32.mrf.mxu0
        %925 = vdwg.mxu0
        %v926 = vmul.f32 %v921, 0.35355338
        %vm927 = vcmp.eq.bf16.partialorder %v697, 0
        %v928 = vsel %vm927, 65537, 0
        %v929 = vunpack.c.l.b16 %v928
        %vm930 = vcmp.ne.s32.totalorder %v929, 0
        %v931 = vsel %vm930, -1e+20, %v926
        %v932 = vsel %vm879, %v931, -inf
        %933 = vmax.xlane.f32.xlu0 %v932
        %v934 = vpop.xlane.xlu0 %933
        %v935 = vsub.f32 %v931, %v934
        %v936 = vmul.f32 %v935, 1.442695
        %v937 = vpow.pop %v936
        %v938 = vsel %vm879, %v937, 0.0
        %939 = vadd.xlane.f32.xlu0 %v938
        %v940 = vpop.xlane.xlu0 %939
        %v941 = vrcp.pop %v940
        %v942 = vmul.f32 %v937, %v941
        %v943 = vpack.c.bf16 %v942, %v942
        %v945 = vsel %vm879, %v943, 0
        %vm947 = vcmask 1043456
        %v949 = vsel %vm947, %v878, 0
        %951 = vmatprep.subr.bf16.mxu0 0
        %952 = vmatpush1.bf16.msra.mxu0 0
        %953 = vmatprep.subr.bf16.mxu0 0
        %954 = vmatpush1.bf16.msra.mxu0 0
        %955 = vmatprep.subr.bf16.mxu0 0
        %956 = vmatpush1.bf16.msra.mxu0 0
        %957 = vmatprep.subr.bf16.mxu0 0
        %958 = vmatpush1.bf16.msra.mxu0 0
        %959 = vmatprep.subr.bf16.mxu0 0
        %960 = vmatpush1.bf16.msra.mxu0 0
        %961 = vmatprep.subr.bf16.mxu0 0
        %962 = vmatpush1.bf16.msra.mxu0 0
        %963 = vmatprep.subr.bf16.mxu0 0
        %964 = vmatpush1.bf16.msra.mxu0 0
        %965 = vmatprep.subr.bf16.mxu0 0
        %966 = vmatpush1.bf16.msra.mxu0 %v949
        %967 = vmatprep.subr.bf16.mxu0 0
        %968 = vmatpush2.bf16.msra.mxu0 0
        %969 = vmatprep.subr.bf16.mxu0 0
        %970 = vmatpush2.bf16.msra.mxu0 0
        %971 = vmatprep.subr.bf16.mxu0 0
        %972 = vmatpush2.bf16.msra.mxu0 0
        %973 = vmatprep.subr.bf16.mxu0 0
        %974 = vmatpush2.bf16.msra.mxu0 0
        %975 = vmatprep.subr.bf16.mxu0 0
        %976 = vmatpush2.bf16.msra.mxu0 0
        %977 = vmatprep.subr.bf16.mxu0 0
        %978 = vmatpush2.bf16.msra.mxu0 0
        %979 = vmatprep.subr.bf16.mxu0 0
        %980 = vmatpush2.bf16.msra.mxu0 0
        %981 = vmatprep.subr.bf16.mxu0 0
        %982 = vmatpush2.bf16.msra.mxu0 0
        %983 = vmatprep.mubr.bf16.mxu0 0
        %984 = vmatmul.mubr.bf16.gmra.mxu0 %v945
        %v985 = vpop.f32.mrf.mxu0
        %v986 = vadd.f32 0.0, %v985
        %v987 = vpop.f32.mrf.mxu0
        %v988 = vpop.f32.mrf.mxu0
        %v989 = vpop.f32.mrf.mxu0
        %990 = vdwg.mxu0
        %992 = vrot.lane.b32.xlu0 %v876, 120
        %v993 = vpop.permute.xlu0 %992
        %995 = vrot.lane.b32.xlu0 %v877, 120
        %v996 = vpop.permute.xlu0 %995
        %v998 = vsel %vm879, %v993, 0
        %v1001 = vsel %vm879, %v996, 0
        %1003 = vmatprep.subr.bf16.mxu0 0
        %1004 = vmatpush1.bf16.xpose.msra.mxu0 0
        %1005 = vmatprep.subr.bf16.mxu0 0
        %1006 = vmatpush1.bf16.xpose.msra.mxu0 0
        %1007 = vmatprep.subr.bf16.mxu0 0
        %1008 = vmatpush1.bf16.xpose.msra.mxu0 0
        %1009 = vmatprep.subr.bf16.mxu0 0
        %1010 = vmatpush1.bf16.xpose.msra.mxu0 0
        %1011 = vmatprep.subr.bf16.mxu0 0
        %1012 = vmatpush1.bf16.xpose.msra.mxu0 0
        %1013 = vmatprep.subr.bf16.mxu0 0
        %1014 = vmatpush1.bf16.xpose.msra.mxu0 0
        %1015 = vmatprep.subr.bf16.mxu0 0
        %1016 = vmatpush1.bf16.xpose.msra.mxu0 0
        %1017 = vmatprep.subr.bf16.mxu0 0
        %1018 = vmatpush1.bf16.xpose.msra.mxu0 %v1001
        %1019 = vmatprep.subr.bf16.mxu0 0
        %1020 = vmatpush2.bf16.xpose.msra.mxu0 0
        %1021 = vmatprep.subr.bf16.mxu0 0
        %1022 = vmatpush2.bf16.xpose.msra.mxu0 0
        %1023 = vmatprep.subr.bf16.mxu0 0
        %1024 = vmatpush2.bf16.xpose.msra.mxu0 0
        %1025 = vmatprep.subr.bf16.mxu0 0
        %1026 = vmatpush2.bf16.xpose.msra.mxu0 0
        %1027 = vmatprep.subr.bf16.mxu0 0
        %1028 = vmatpush2.bf16.xpose.msra.mxu0 0
        %1029 = vmatprep.subr.bf16.mxu0 0
        %1030 = vmatpush2.bf16.xpose.msra.mxu0 0
        %1031 = vmatprep.subr.bf16.mxu0 0
        %1032 = vmatpush2.bf16.xpose.msra.mxu0 0
        %1033 = vmatprep.subr.bf16.mxu0 0
        %1034 = vmatpush2.bf16.xpose.msra.mxu0 0
        %1035 = vmatprep.mubr.bf16.mxu0 0
        %1036 = vmatmul.mubr.bf16.gmra.mxu0 %v998
        %v1037 = vpop.f32.mrf.mxu0
        %v1038 = vadd.f32 0.0, %v1037
        %v1039 = vpop.f32.mrf.mxu0
        %v1040 = vpop.f32.mrf.mxu0
        %v1041 = vpop.f32.mrf.mxu0
        %1042 = vdwg.mxu0
        %v1043 = vmul.f32 %v1038, 0.35355338
        %v1044 = vsel %vm930, -1e+20, %v1043
        %v1045 = vsel %vm879, %v1044, -inf
        %1046 = vmax.xlane.f32.xlu0 %v1045
        %v1047 = vpop.xlane.xlu0 %1046
        %v1048 = vsub.f32 %v1044, %v1047
        %v1049 = vmul.f32 %v1048, 1.442695
        %v1050 = vpow.pop %v1049
        %v1051 = vsel %vm879, %v1050, 0.0
        %1052 = vadd.xlane.f32.xlu0 %v1051
        %v1053 = vpop.xlane.xlu0 %1052
        %v1054 = vrcp.pop %v1053
        %v1055 = vmul.f32 %v1050, %v1054
        %v1056 = vpack.c.bf16 %v1055, %v1055
        %1058 = vrot.lane.b32.xlu0 %v878, 120
        %v1059 = vpop.permute.xlu0 %1058
        %v1061 = vsel %vm879, %v1056, 0
        %v1064 = vsel %vm947, %v1059, 0
        %1066 = vmatprep.subr.bf16.mxu0 0
        %1067 = vmatpush1.bf16.msra.mxu0 0
        %1068 = vmatprep.subr.bf16.mxu0 0
        %1069 = vmatpush1.bf16.msra.mxu0 0
        %1070 = vmatprep.subr.bf16.mxu0 0
        %1071 = vmatpush1.bf16.msra.mxu0 0
        %1072 = vmatprep.subr.bf16.mxu0 0
        %1073 = vmatpush1.bf16.msra.mxu0 0
        %1074 = vmatprep.subr.bf16.mxu0 0
        %1075 = vmatpush1.bf16.msra.mxu0 0
        %1076 = vmatprep.subr.bf16.mxu0 0
        %1077 = vmatpush1.bf16.msra.mxu0 0
        %1078 = vmatprep.subr.bf16.mxu0 0
        %1079 = vmatpush1.bf16.msra.mxu0 0
        %1080 = vmatprep.subr.bf16.mxu0 0
        %1081 = vmatpush1.bf16.msra.mxu0 %v1064
        %1082 = vmatprep.subr.bf16.mxu0 0
        %1083 = vmatpush2.bf16.msra.mxu0 0
        %1084 = vmatprep.subr.bf16.mxu0 0
        %1085 = vmatpush2.bf16.msra.mxu0 0
        %1086 = vmatprep.subr.bf16.mxu0 0
        %1087 = vmatpush2.bf16.msra.mxu0 0
        %1088 = vmatprep.subr.bf16.mxu0 0
        %1089 = vmatpush2.bf16.msra.mxu0 0
        %1090 = vmatprep.subr.bf16.mxu0 0
        %1091 = vmatpush2.bf16.msra.mxu0 0
        %1092 = vmatprep.subr.bf16.mxu0 0
        %1093 = vmatpush2.bf16.msra.mxu0 0
        %1094 = vmatprep.subr.bf16.mxu0 0
        %1095 = vmatpush2.bf16.msra.mxu0 0
        %1096 = vmatprep.subr.bf16.mxu0 0
        %1097 = vmatpush2.bf16.msra.mxu0 0
        %1098 = vmatprep.mubr.bf16.mxu0 0
        %1099 = vmatmul.mubr.bf16.gmra.mxu0 %v1061
        %v1100 = vpop.f32.mrf.mxu0
        %v1101 = vadd.f32 0.0, %v1100
        %v1102 = vpop.f32.mrf.mxu0
        %v1103 = vpop.f32.mrf.mxu0
        %v1104 = vpop.f32.mrf.mxu0
        %1105 = vdwg.mxu0
        %1106 = vrot.lane.b32.xlu0 %v876, 112
        %v1107 = vpop.permute.xlu0 %1106
        %1108 = vrot.lane.b32.xlu0 %v877, 112
        %v1109 = vpop.permute.xlu0 %1108
        %v1111 = vsel %vm879, %v1107, 0
        %v1114 = vsel %vm879, %v1109, 0
        %1116 = vmatprep.subr.bf16.mxu0 0
        %1117 = vmatpush1.bf16.xpose.msra.mxu0 0
        %1118 = vmatprep.subr.bf16.mxu0 0
        %1119 = vmatpush1.bf16.xpose.msra.mxu0 0
        %1120 = vmatprep.subr.bf16.mxu0 0
        %1121 = vmatpush1.bf16.xpose.msra.mxu0 0
        %1122 = vmatprep.subr.bf16.mxu0 0
        %1123 = vmatpush1.bf16.xpose.msra.mxu0 0
        %1124 = vmatprep.subr.bf16.mxu0 0
        %1125 = vmatpush1.bf16.xpose.msra.mxu0 0
        %1126 = vmatprep.subr.bf16.mxu0 0
        %1127 = vmatpush1.bf16.xpose.msra.mxu0 0
        %1128 = vmatprep.subr.bf16.mxu0 0
        %1129 = vmatpush1.bf16.xpose.msra.mxu0 0
        %1130 = vmatprep.subr.bf16.mxu0 0
        %1131 = vmatpush1.bf16.xpose.msra.mxu0 %v1114
        %1132 = vmatprep.subr.bf16.mxu0 0
        %1133 = vmatpush2.bf16.xpose.msra.mxu0 0
        %1134 = vmatprep.subr.bf16.mxu0 0
        %1135 = vmatpush2.bf16.xpose.msra.mxu0 0
        %1136 = vmatprep.subr.bf16.mxu0 0
        %1137 = vmatpush2.bf16.xpose.msra.mxu0 0
        %1138 = vmatprep.subr.bf16.mxu0 0
        %1139 = vmatpush2.bf16.xpose.msra.mxu0 0
        %1140 = vmatprep.subr.bf16.mxu0 0
        %1141 = vmatpush2.bf16.xpose.msra.mxu0 0
        %1142 = vmatprep.subr.bf16.mxu0 0
        %1143 = vmatpush2.bf16.xpose.msra.mxu0 0
        %1144 = vmatprep.subr.bf16.mxu0 0
        %1145 = vmatpush2.bf16.xpose.msra.mxu0 0
        %1146 = vmatprep.subr.bf16.mxu0 0
        %1147 = vmatpush2.bf16.xpose.msra.mxu0 0
        %1148 = vmatprep.mubr.bf16.mxu0 0
        %1149 = vmatmul.mubr.bf16.gmra.mxu0 %v1111
        %v1150 = vpop.f32.mrf.mxu0
        %v1151 = vadd.f32 0.0, %v1150
        %v1152 = vpop.f32.mrf.mxu0
        %v1153 = vpop.f32.mrf.mxu0
        %v1154 = vpop.f32.mrf.mxu0
        %1155 = vdwg.mxu0
        %v1156 = vmul.f32 %v1151, 0.35355338
        %v1157 = vsel %vm930, -1e+20, %v1156
        %v1158 = vsel %vm879, %v1157, -inf
        %1159 = vmax.xlane.f32.xlu0 %v1158
        %v1160 = vpop.xlane.xlu0 %1159
        %v1161 = vsub.f32 %v1157, %v1160
        %v1162 = vmul.f32 %v1161, 1.442695
        %v1163 = vpow.pop %v1162
        %v1164 = vsel %vm879, %v1163, 0.0
        %1165 = vadd.xlane.f32.xlu0 %v1164
        %v1166 = vpop.xlane.xlu0 %1165
        %v1167 = vrcp.pop %v1166
        %v1168 = vmul.f32 %v1163, %v1167
        %v1169 = vpack.c.bf16 %v1168, %v1168
        %1170 = vrot.lane.b32.xlu0 %v878, 112
        %v1171 = vpop.permute.xlu0 %1170
        %v1173 = vsel %vm879, %v1169, 0
        %v1176 = vsel %vm947, %v1171, 0
        %1178 = vmatprep.subr.bf16.mxu0 0
        %1179 = vmatpush1.bf16.msra.mxu0 0
        %1180 = vmatprep.subr.bf16.mxu0 0
        %1181 = vmatpush1.bf16.msra.mxu0 0
        %1182 = vmatprep.subr.bf16.mxu0 0
        %1183 = vmatpush1.bf16.msra.mxu0 0
        %1184 = vmatprep.subr.bf16.mxu0 0
        %1185 = vmatpush1.bf16.msra.mxu0 0
        %1186 = vmatprep.subr.bf16.mxu0 0
        %1187 = vmatpush1.bf16.msra.mxu0 0
        %1188 = vmatprep.subr.bf16.mxu0 0
        %1189 = vmatpush1.bf16.msra.mxu0 0
        %1190 = vmatprep.subr.bf16.mxu0 0
        %1191 = vmatpush1.bf16.msra.mxu0 0
        %1192 = vmatprep.subr.bf16.mxu0 0
        %1193 = vmatpush1.bf16.msra.mxu0 %v1176
        %1194 = vmatprep.subr.bf16.mxu0 0
        %1195 = vmatpush2.bf16.msra.mxu0 0
        %1196 = vmatprep.subr.bf16.mxu0 0
        %1197 = vmatpush2.bf16.msra.mxu0 0
        %1198 = vmatprep.subr.bf16.mxu0 0
        %1199 = vmatpush2.bf16.msra.mxu0 0
        %1200 = vmatprep.subr.bf16.mxu0 0
        %1201 = vmatpush2.bf16.msra.mxu0 0
        %1202 = vmatprep.subr.bf16.mxu0 0
        %1203 = vmatpush2.bf16.msra.mxu0 0
        %1204 = vmatprep.subr.bf16.mxu0 0
        %1205 = vmatpush2.bf16.msra.mxu0 0
        %1206 = vmatprep.subr.bf16.mxu0 0
        %1207 = vmatpush2.bf16.msra.mxu0 0
        %1208 = vmatprep.subr.bf16.mxu0 0
        %1209 = vmatpush2.bf16.msra.mxu0 0
        %1210 = vmatprep.mubr.bf16.mxu0 0
        %1211 = vmatmul.mubr.bf16.gmra.mxu0 %v1173
        %v1212 = vpop.f32.mrf.mxu0
        %v1213 = vadd.f32 0.0, %v1212
        %v1214 = vpop.f32.mrf.mxu0
        %v1215 = vpop.f32.mrf.mxu0
        %v1216 = vpop.f32.mrf.mxu0
        %1217 = vdwg.mxu0
        %1218 = vrot.lane.b32.xlu0 %v876, 104
        %v1219 = vpop.permute.xlu0 %1218
        %1220 = vrot.lane.b32.xlu0 %v877, 104
        %v1221 = vpop.permute.xlu0 %1220
        %v1223 = vsel %vm879, %v1219, 0
        %v1226 = vsel %vm879, %v1221, 0
        %1228 = vmatprep.subr.bf16.mxu0 0
        %1229 = vmatpush1.bf16.xpose.msra.mxu0 0
        %1230 = vmatprep.subr.bf16.mxu0 0
        %1231 = vmatpush1.bf16.xpose.msra.mxu0 0
        %1232 = vmatprep.subr.bf16.mxu0 0
        %1233 = vmatpush1.bf16.xpose.msra.mxu0 0
        %1234 = vmatprep.subr.bf16.mxu0 0
        %1235 = vmatpush1.bf16.xpose.msra.mxu0 0
        %1236 = vmatprep.subr.bf16.mxu0 0
        %1237 = vmatpush1.bf16.xpose.msra.mxu0 0
        %1238 = vmatprep.subr.bf16.mxu0 0
        %1239 = vmatpush1.bf16.xpose.msra.mxu0 0
        %1240 = vmatprep.subr.bf16.mxu0 0
        %1241 = vmatpush1.bf16.xpose.msra.mxu0 0
        %1242 = vmatprep.subr.bf16.mxu0 0
        %1243 = vmatpush1.bf16.xpose.msra.mxu0 %v1226
        %1244 = vmatprep.subr.bf16.mxu0 0
        %1245 = vmatpush2.bf16.xpose.msra.mxu0 0
        %1246 = vmatprep.subr.bf16.mxu0 0
        %1247 = vmatpush2.bf16.xpose.msra.mxu0 0
        %1248 = vmatprep.subr.bf16.mxu0 0
        %1249 = vmatpush2.bf16.xpose.msra.mxu0 0
        %1250 = vmatprep.subr.bf16.mxu0 0
        %1251 = vmatpush2.bf16.xpose.msra.mxu0 0
        %1252 = vmatprep.subr.bf16.mxu0 0
        %1253 = vmatpush2.bf16.xpose.msra.mxu0 0
        %1254 = vmatprep.subr.bf16.mxu0 0
        %1255 = vmatpush2.bf16.xpose.msra.mxu0 0
        %1256 = vmatprep.subr.bf16.mxu0 0
        %1257 = vmatpush2.bf16.xpose.msra.mxu0 0
        %1258 = vmatprep.subr.bf16.mxu0 0
        %1259 = vmatpush2.bf16.xpose.msra.mxu0 0
        %1260 = vmatprep.mubr.bf16.mxu0 0
        %1261 = vmatmul.mubr.bf16.gmra.mxu0 %v1223
        %v1262 = vpop.f32.mrf.mxu0
        %v1263 = vadd.f32 0.0, %v1262
        %v1264 = vpop.f32.mrf.mxu0
        %v1265 = vpop.f32.mrf.mxu0
        %v1266 = vpop.f32.mrf.mxu0
        %1267 = vdwg.mxu0
        %v1268 = vmul.f32 %v1263, 0.35355338
        %v1269 = vsel %vm930, -1e+20, %v1268
        %v1270 = vsel %vm879, %v1269, -inf
        %1271 = vmax.xlane.f32.xlu0 %v1270
        %v1272 = vpop.xlane.xlu0 %1271
        %v1273 = vsub.f32 %v1269, %v1272
        %v1274 = vmul.f32 %v1273, 1.442695
        %v1275 = vpow.pop %v1274
        %v1276 = vsel %vm879, %v1275, 0.0
        %1277 = vadd.xlane.f32.xlu0 %v1276
        %v1278 = vpop.xlane.xlu0 %1277
        %v1279 = vrcp.pop %v1278
        %v1280 = vmul.f32 %v1275, %v1279
        %v1281 = vpack.c.bf16 %v1280, %v1280
        %1282 = vrot.lane.b32.xlu0 %v878, 104
        %v1283 = vpop.permute.xlu0 %1282
        %v1285 = vsel %vm879, %v1281, 0
        %v1288 = vsel %vm947, %v1283, 0
        %1290 = vmatprep.subr.bf16.mxu0 0
        %1291 = vmatpush1.bf16.msra.mxu0 0
        %1292 = vmatprep.subr.bf16.mxu0 0
        %1293 = vmatpush1.bf16.msra.mxu0 0
        %1294 = vmatprep.subr.bf16.mxu0 0
        %1295 = vmatpush1.bf16.msra.mxu0 0
        %1296 = vmatprep.subr.bf16.mxu0 0
        %1297 = vmatpush1.bf16.msra.mxu0 0
        %1298 = vmatprep.subr.bf16.mxu0 0
        %1299 = vmatpush1.bf16.msra.mxu0 0
        %1300 = vmatprep.subr.bf16.mxu0 0
        %1301 = vmatpush1.bf16.msra.mxu0 0
        %1302 = vmatprep.subr.bf16.mxu0 0
        %1303 = vmatpush1.bf16.msra.mxu0 0
        %1304 = vmatprep.subr.bf16.mxu0 0
        %1305 = vmatpush1.bf16.msra.mxu0 %v1288
        %1306 = vmatprep.subr.bf16.mxu0 0
        %1307 = vmatpush2.bf16.msra.mxu0 0
        %1308 = vmatprep.subr.bf16.mxu0 0
        %1309 = vmatpush2.bf16.msra.mxu0 0
        %1310 = vmatprep.subr.bf16.mxu0 0
        %1311 = vmatpush2.bf16.msra.mxu0 0
        %1312 = vmatprep.subr.bf16.mxu0 0
        %1313 = vmatpush2.bf16.msra.mxu0 0
        %1314 = vmatprep.subr.bf16.mxu0 0
        %1315 = vmatpush2.bf16.msra.mxu0 0
        %1316 = vmatprep.subr.bf16.mxu0 0
        %1317 = vmatpush2.bf16.msra.mxu0 0
        %1318 = vmatprep.subr.bf16.mxu0 0
        %1319 = vmatpush2.bf16.msra.mxu0 0
        %1320 = vmatprep.subr.bf16.mxu0 0
        %1321 = vmatpush2.bf16.msra.mxu0 0
        %1322 = vmatprep.mubr.bf16.mxu0 0
        %1323 = vmatmul.mubr.bf16.gmra.mxu0 %v1285
        %v1324 = vpop.f32.mrf.mxu0
        %v1325 = vadd.f32 0.0, %v1324
        %v1326 = vpop.f32.mrf.mxu0
        %v1327 = vpop.f32.mrf.mxu0
        %v1328 = vpop.f32.mrf.mxu0
        %1329 = vdwg.mxu0
        %1331 = vrot.lane.b32.xlu0 %v1101, 8
        %v1332 = vpop.permute.xlu0 %1331
        %1335 = vrot.lane.b32.xlu0 %v1213, 16
        %v1336 = vpop.permute.xlu0 %1335
        %1339 = vrot.lane.b32.xlu0 %v1325, 24
        %v1340 = vpop.permute.xlu0 %1339
        %v1342 = vsel %vm879, %v986, %v1332
        %vm1343 = vcmask 130048
        %v1344 = vsel %vm1343, %v1342, %v1336
        %vm1345 = vcmask 195584
        %v1346 = vsel %vm1345, %v1344, %v1340
        %v1347 = vpack.c.bf16 %v1346, %v1346
        %v1348 = vld [vmem:[#allocation10] sm:$0xf]
        %v1349 = vld [vmem:[#allocation10 + $0x4] sm:$0xf]
        %v1350 = vld [vmem:[#allocation10 + $0x8] sm:$0xf]
        %v1351 = vld [vmem:[#allocation10 + $0xc] sm:$0xf]
        %v1352 = vld [vmem:[%s8] sm:$0x1]
        %v1354 = vlaneseq
        %v1355 = vshrl.u32 %v1354, 7
        %v1356 = vsub.s32 0, %v1355
        %v1357 = vrot.slane %v1352, %v1356
        %v1363 = vunpack.c.l.b16 %v1348
        %v1364 = vunpack.c.l.b16 %v1349
        %v1365 = vunpack.c.l.b16 %v1350
        %v1366 = vunpack.c.l.b16 %v1351
        %v1367 = vpack.c.b16 %v1364, %v1363
        %v1368 = vpack.c.b16 %v1366, %v1365
        %v1372 = vsel %vm714, %v1347, 0
        %1374 = vmatprep.subr.bf16.mxu0 0
        %1375 = vmatpush1.bf16.msra.mxu0 0
        %1376 = vmatprep.subr.bf16.mxu0 0
        %1377 = vmatpush1.bf16.msra.mxu0 0
        %1378 = vmatprep.subr.bf16.mxu0 0
        %1379 = vmatpush1.bf16.msra.mxu0 0
        %1380 = vmatprep.subr.bf16.mxu0 0
        %1381 = vmatpush1.bf16.msra.mxu0 0
        %1382 = vmatprep.subr.bf16.mxu0 0
        %1383 = vmatpush1.bf16.msra.mxu0 0
        %1384 = vmatprep.subr.bf16.mxu0 0
        %1385 = vmatpush1.bf16.msra.mxu0 0
        %1386 = vmatprep.subr.bf16.mxu0 0
        %1387 = vmatpush1.bf16.msra.mxu0 %v1368
        %1388 = vmatprep.subr.bf16.mxu0 0
        %1389 = vmatpush1.bf16.msra.mxu0 %v1367
        %1390 = vmatprep.subr.bf16.mxu0 0
        %1391 = vmatpush2.bf16.msra.mxu0 0
        %1392 = vmatprep.subr.bf16.mxu0 0
        %1393 = vmatpush2.bf16.msra.mxu0 0
        %1394 = vmatprep.subr.bf16.mxu0 0
        %1395 = vmatpush2.bf16.msra.mxu0 0
        %1396 = vmatprep.subr.bf16.mxu0 0
        %1397 = vmatpush2.bf16.msra.mxu0 0
        %1398 = vmatprep.subr.bf16.mxu0 0
        %1399 = vmatpush2.bf16.msra.mxu0 0
        %1400 = vmatprep.subr.bf16.mxu0 0
        %1401 = vmatpush2.bf16.msra.mxu0 0
        %1402 = vmatprep.subr.bf16.mxu0 0
        %1403 = vmatpush2.bf16.msra.mxu0 0
        %1404 = vmatprep.subr.bf16.mxu0 0
        %1405 = vmatpush2.bf16.msra.mxu0 0
        %1406 = vmatprep.mubr.bf16.mxu0 0
        %1407 = vmatmul.mubr.bf16.gmra.mxu0 %v1372
        %v1408 = vpop.f32.mrf.mxu0
        %v1409 = vadd.f32 %v1357, %v1408
        %v1410 = vpop.f32.mrf.mxu0
        %v1411 = vpop.f32.mrf.mxu0
        %v1412 = vpop.f32.mrf.mxu0
        %1413 = vdwg.mxu0
        %v1414 = vadd.f32 %v1409, %v691
        %v1415 = vsel %vm714, %v1414, 0.0
        %1416 = vadd.xlane.f32.xlu0 %v1415
        %v1417 = vpop.xlane.xlu0 %1416
        %v1418 = vrcp.pop 32.0
        %v1419 = vmul.f32 %v1417, %v1418
        %v1420 = vsub.f32 %v1414, %v1419
        %v1421 = vmul.f32 %v1420, %v1420
        %v1422 = vsel %vm714, %v1421, 0.0
        %1423 = vadd.xlane.f32.xlu0 %v1422
        %v1424 = vpop.xlane.xlu0 %1423
        %v1425 = vmul.f32 %v1424, %v1418
        %v1426 = vadd.f32 %v1425, 1e-05
        %v1427 = vrsqrt.pop %v1426
        %v1428 = vmul.f32 %v1420, %v1427
        %v1429 = vld [vmem:[%s9] sm:$0x1]
        %v1431 = vlaneseq
        %v1432 = vshrl.u32 %v1431, 7
        %v1433 = vsub.s32 0, %v1432
        %v1434 = vrot.slane %v1429, %v1433
        %v1436 = vmul.f32 %v1428, %v1434
        %v1437 = vld [vmem:[%s10] sm:$0x1]
        %v1439 = vlaneseq
        %v1440 = vshrl.u32 %v1439, 7
        %v1441 = vsub.s32 0, %v1440
        %v1442 = vrot.slane %v1437, %v1441
        %v1444 = vadd.f32 %v1436, %v1442
        %v1445 = vpack.c.bf16 %v1444, %v1444
        %v1446 = vld [vmem:[#allocation11] sm:$0xf]
        %v1447 = vld [vmem:[#allocation11 + $0x4] sm:$0xf]
        %v1448 = vld [vmem:[#allocation11 + $0x8] sm:$0xf]
        %v1449 = vld [vmem:[#allocation11 + $0xc] sm:$0xf]
        %v1450 = vld [vmem:[%s12] sm:$0x1]
        %v1452 = vlaneseq
        %v1453 = vshrl.u32 %v1452, 7
        %v1454 = vsub.s32 0, %v1453
        %v1455 = vrot.slane %v1450, %v1454
        %v1461 = vunpack.c.l.b16 %v1446
        %v1462 = vunpack.c.l.b16 %v1447
        %v1463 = vunpack.c.l.b16 %v1448
        %v1464 = vunpack.c.l.b16 %v1449
        %v1465 = vpack.c.b16 %v1462, %v1461
        %v1466 = vpack.c.b16 %v1464, %v1463
        %v1470 = vsel %vm714, %v1445, 0
        %1472 = vmatprep.subr.bf16.mxu0 0
        %1473 = vmatpush1.bf16.msra.mxu0 0
        %1474 = vmatprep.subr.bf16.mxu0 0
        %1475 = vmatpush1.bf16.msra.mxu0 0
        %1476 = vmatprep.subr.bf16.mxu0 0
        %1477 = vmatpush1.bf16.msra.mxu0 0
        %1478 = vmatprep.subr.bf16.mxu0 0
        %1479 = vmatpush1.bf16.msra.mxu0 0
        %1480 = vmatprep.subr.bf16.mxu0 0
        %1481 = vmatpush1.bf16.msra.mxu0 0
        %1482 = vmatprep.subr.bf16.mxu0 0
        %1483 = vmatpush1.bf16.msra.mxu0 0
        %1484 = vmatprep.subr.bf16.mxu0 0
        %1485 = vmatpush1.bf16.msra.mxu0 %v1466
        %1486 = vmatprep.subr.bf16.mxu0 0
        %1487 = vmatpush1.bf16.msra.mxu0 %v1465
        %1488 = vmatprep.subr.bf16.mxu0 0
        %1489 = vmatpush2.bf16.msra.mxu0 0
        %1490 = vmatprep.subr.bf16.mxu0 0
        %1491 = vmatpush2.bf16.msra.mxu0 0
        %1492 = vmatprep.subr.bf16.mxu0 0
        %1493 = vmatpush2.bf16.msra.mxu0 0
        %1494 = vmatprep.subr.bf16.mxu0 0
        %1495 = vmatpush2.bf16.msra.mxu0 0
        %1496 = vmatprep.subr.bf16.mxu0 0
        %1497 = vmatpush2.bf16.msra.mxu0 0
        %1498 = vmatprep.subr.bf16.mxu0 0
        %1499 = vmatpush2.bf16.msra.mxu0 0
        %1500 = vmatprep.subr.bf16.mxu0 0
        %1501 = vmatpush2.bf16.msra.mxu0 0
        %1502 = vmatprep.subr.bf16.mxu0 0
        %1503 = vmatpush2.bf16.msra.mxu0 0
        %1504 = vmatprep.mubr.bf16.mxu0 0
        %1505 = vmatmul.mubr.bf16.gmra.mxu0 %v1470
        %v1506 = vpop.f32.mrf.mxu0
        %v1507 = vadd.f32 %v1455, %v1506
        %v1508 = vpop.f32.mrf.mxu0
        %v1509 = vpop.f32.mrf.mxu0
        %v1510 = vpop.f32.mrf.mxu0
        %1511 = vdwg.mxu0
        %v1512 = vmax.f32 %v1507, 0.0
        %v1513 = vpack.c.bf16 %v1512, %v1512
        %v1514 = vld [vmem:[%s13] sm:$0xf]
        %v1515 = vld [vmem:[%s13 + $0x4] sm:$0xf]
        %v1516 = vld [vmem:[%s13 + $0x8] sm:$0xf]
        %v1517 = vld [vmem:[%s13 + $0xc] sm:$0xf]
        %v1518 = vld [vmem:[%s13 + $0x10] sm:$0xf]
        %v1519 = vld [vmem:[%s13 + $0x14] sm:$0xf]
        %v1520 = vld [vmem:[%s13 + $0x18] sm:$0xf]
        %v1521 = vld [vmem:[%s13 + $0x1c] sm:$0xf]
        %v1522 = vld [vmem:[%s14] sm:$0x1]
        %v1524 = vlaneseq
        %v1525 = vshrl.u32 %v1524, 7
        %v1526 = vsub.s32 0, %v1525
        %v1527 = vrot.slane %v1522, %v1526
        %v1537 = vunpack.c.l.b16 %v1514
        %v1538 = vunpack.c.l.b16 %v1515
        %v1539 = vunpack.c.l.b16 %v1516
        %v1540 = vunpack.c.l.b16 %v1517
        %v1541 = vunpack.c.l.b16 %v1518
        %v1542 = vunpack.c.l.b16 %v1519
        %v1543 = vunpack.c.l.b16 %v1520
        %v1544 = vunpack.c.l.b16 %v1521
        %v1545 = vpack.c.b16 %v1538, %v1537
        %v1546 = vpack.c.b16 %v1540, %v1539
        %v1547 = vpack.c.b16 %v1542, %v1541
        %v1548 = vpack.c.b16 %v1544, %v1543
        %vm1553 = vcmask 523264
        %v1555 = vsel %vm1553, %v1513, 0
        %1557 = vmatprep.subr.bf16.mxu0 0
        %1558 = vmatpush1.bf16.msra.mxu0 0
        %1559 = vmatprep.subr.bf16.mxu0 0
        %1560 = vmatpush1.bf16.msra.mxu0 0
        %1561 = vmatprep.subr.bf16.mxu0 0
        %1562 = vmatpush1.bf16.msra.mxu0 0
        %1563 = vmatprep.subr.bf16.mxu0 0
        %1564 = vmatpush1.bf16.msra.mxu0 0
        %1565 = vmatprep.subr.bf16.mxu0 0
        %1566 = vmatpush1.bf16.msra.mxu0 %v1548
        %1567 = vmatprep.subr.bf16.mxu0 0
        %1568 = vmatpush1.bf16.msra.mxu0 %v1547
        %1569 = vmatprep.subr.bf16.mxu0 0
        %1570 = vmatpush1.bf16.msra.mxu0 %v1546
        %1571 = vmatprep.subr.bf16.mxu0 0
        %1572 = vmatpush1.bf16.msra.mxu0 %v1545
        %1573 = vmatprep.subr.bf16.mxu0 0
        %1574 = vmatpush2.bf16.msra.mxu0 0
        %1575 = vmatprep.subr.bf16.mxu0 0
        %1576 = vmatpush2.bf16.msra.mxu0 0
        %1577 = vmatprep.subr.bf16.mxu0 0
        %1578 = vmatpush2.bf16.msra.mxu0 0
        %1579 = vmatprep.subr.bf16.mxu0 0
        %1580 = vmatpush2.bf16.msra.mxu0 0
        %1581 = vmatprep.subr.bf16.mxu0 0
        %1582 = vmatpush2.bf16.msra.mxu0 0
        %1583 = vmatprep.subr.bf16.mxu0 0
        %1584 = vmatpush2.bf16.msra.mxu0 0
        %1585 = vmatprep.subr.bf16.mxu0 0
        %1586 = vmatpush2.bf16.msra.mxu0 0
        %1587 = vmatprep.subr.bf16.mxu0 0
        %1588 = vmatpush2.bf16.msra.mxu0 0
        %1589 = vmatprep.mubr.bf16.mxu0 0
        %1590 = vmatmul.mubr.bf16.gmra.mxu0 %v1555
        %v1591 = vpop.f32.mrf.mxu0
        %v1592 = vadd.f32 %v1527, %v1591
        %v1593 = vpop.f32.mrf.mxu0
        %v1594 = vpop.f32.mrf.mxu0
        %v1595 = vpop.f32.mrf.mxu0
        %1596 = vdwg.mxu0
        %v1597 = vadd.f32 %v1592, %v1444
        %v1598 = vsel %vm714, %v1597, 0.0
        %1599 = vadd.xlane.f32.xlu0 %v1598
        %v1600 = vpop.xlane.xlu0 %1599
        %v1601 = vmul.f32 %v1600, %v1418
        %v1602 = vsub.f32 %v1597, %v1601
        %v1603 = vmul.f32 %v1602, %v1602
        %v1604 = vsel %vm714, %v1603, 0.0
        %1605 = vadd.xlane.f32.xlu0 %v1604
        %v1606 = vpop.xlane.xlu0 %1605
        %v1607 = vmul.f32 %v1606, %v1418
        %v1608 = vadd.f32 %v1607, 1e-05
        %v1609 = vrsqrt.pop %v1608
        %v1610 = vmul.f32 %v1602, %v1609
        %v1611 = vld [vmem:[%s15] sm:$0x1]
        %v1613 = vlaneseq
        %v1614 = vshrl.u32 %v1613, 7
        %v1615 = vsub.s32 0, %v1614
        %v1616 = vrot.slane %v1611, %v1615
        %v1618 = vmul.f32 %v1610, %v1616
        %v1619 = vld [vmem:[%s16] sm:$0x1]
        %v1621 = vlaneseq
        %v1622 = vshrl.u32 %v1621, 7
        %v1623 = vsub.s32 0, %v1622
        %v1624 = vrot.slane %v1619, %v1623
        %v1626 = vadd.f32 %v1618, %v1624
        %1627 = vst.msk [vmem:[%s675] sm:$0xff] %vm714, %v1626
        %s1628 = sand.u32 %s422, 1
        %s1629 = scalar_lea.sflag [#allocation4], %s1628
        %s1630 = sand.u32 %s422, 1
        %s1631 = smul.addr %s1630, 8
        %s1632 = scalar_lea.vmem [#allocation13], %s1631
        // Predicated region
        $region113: #{tpu_custom_call.1} parent=87 // pred_check
          %p1633 = pneg %p432
        $region114: #{tpu_custom_call.1} parent=87 // pred_check_branch
          %1635 = sbr.rel (%p1633) target = $region116
        $region115: #{tpu_custom_call.1} parent=87 // pred_region
          %s1637 = ssub.s32 128, 128
          %1638 = vsyncadd %s1629, %s1637
          %s1639 = smul.addr %s37, 128
          %s1640 = scalar_lea.hbm %s17, %s1639
          %s1642 = sshll.u32 %s1632, 4
          %s1643 = int_to_ptr.vmem [resolvable:$true] %s1642
          %1645 = dma.vmem_to_hbm [thread:$0]  %s1643, 128, %s1640, %s1629
        $region116: #{tpu_custom_call.1} parent=87 // pred_fallthru
          _
      $region88: #{tpu_custom_call.1} parent=5 // pred_fallthru
        _
      %p1646 = scmp.le.s32.totalorder 2, %s32
      // Predicated region
      $region117: #{tpu_custom_call.1} parent=5 // pred_check
        %p1647 = pneg %p1646
      $region118: #{tpu_custom_call.1} parent=5 // pred_check_branch
        %1649 = sbr.rel (%p1647) target = $region120
      $region119: #{tpu_custom_call.1} parent=5 // pred_region
        %s1650 = ssub.s32 %s32, 2
        // Predicated region
        $region121: #{tpu_custom_call.1} parent=119 // pred_check
          %p1651 = pneg %p438
        $region122: #{tpu_custom_call.1} parent=119 // pred_check_branch
          %1653 = sbr.rel (%p1651) target = $region124
        $region123: #{tpu_custom_call.1} parent=119 // pred_region
          %s1654 = sand.u32 %s423, 1
          %s1655 = scalar_lea.sflag [#allocation4], %s1654
          %s1656 = sand.u32 %s423, 1
          %s1657 = smul.addr %s1656, 8
          %s1658 = scalar_lea.vmem [#allocation13], %s1657
          %1659 = dma.done %s1655, 128
        $region124: #{tpu_custom_call.1} parent=119 // pred_fallthru
          _
      $region120: #{tpu_custom_call.1} parent=5 // pred_fallthru
        _
    $region6: #{tpu_custom_call.1} parent=1 // loop_footer
      %s36 = sadd.s32 1, %s32
    $region7: #{tpu_custom_call.1} parent=1 // loop_footer_branch
      %31 = sbr.rel target = $region3
    $region8: #{tpu_custom_call.1} parent=1 // loop_exit
      _
    %1660 = vsyncpa [#allocation3], 1
    %s1661 = scalar_lea.sflag [#allocation3], 1
    %1662 = vsyncpa %s1661, 1
    %1663 = vsyncpa [#allocation6], 1
    %1664 = vsyncpa [#allocation9], 1
    %1665 = vsyncpa [#allocation12], 1
    %1666 = vsyncpa [#allocation4], 1
    %s1667 = scalar_lea.sflag [#allocation4], 1
    %1668 = vsyncpa %s1667, 1

</llo_original>
